<compile_context>
chip_gen: v6e
topology: v6e:2x2x1
jax: 0.10.0
libtpu: 0.0.40
codegen_flags: <defaults>
</compile_context>

<pallas_src>
import jax
import jax.numpy as jnp
from jax.experimental import pallas as pl
from jax.experimental.pallas import tpu as pltpu

DISCRETIZE_CFG = dict(mode="UD", depth_min=0.0, depth_max=30000.0, num_bins=32)
Z_CHANNELS = 32            # backbone output channels
HEAD_HIDDEN = 32           # depth-head hidden channels
NUM_BINS = DISCRETIZE_CFG["num_bins"]
RETURN_FEATS = True

# Lane-dim pixel tile.  At 2048 lanes, live VMEM is ~2.5 MiB double-buffered
# for the fused kernel (cols2 bf16 + f32 feats/logits tiles + tiny weights),
# far under the 32 MiB scoped default on v5e/v6e/v7x, while per-step HBM
# bytes are large enough that the ~0.35 us fixed grid-step cost is amortized.
MAX_TILE_PIX = 2048


def _pixel_tile(m, max_tile=MAX_TILE_PIX):
    """Lane-dim tile for the flattened pixel axis.

    If the whole axis fits in one tile, use the full extent (full-dim blocks
    are exempt from the 128-lane divisibility rule -> no padding, no masked
    lanes).  Otherwise use a 128-multiple tile; Pallas masks the ragged last
    block, so no wrapper-side jnp.pad is needed.
    """
    return m if m <= max_tile else max_tile


# ----------------------------------------------------------------------------
# Pallas kernel 1: backbone conv1 (channel-major matmul + bias + ReLU)
# ----------------------------------------------------------------------------
def _conv1_kernel(cols_ref, w_ref, b_ref, y_ref):
    # (Cout, K1) f32 @ (K1, tm) f32 -> (Cout, tm) f32 ; +bias ; ReLU ; bf16 out
    acc = jnp.dot(w_ref[...], cols_ref[0], preferred_element_type=jnp.float32)
    y_ref[0] = jnp.maximum(acc + b_ref[...], 0.0).astype(y_ref.dtype)


def conv1_channel_major(cols, w2d, bias):
    """cols:(B,K1,M) f32, w2d:(Cout,K1), bias:(Cout,) -> (B,Cout,M) bf16."""
    b, k1, m = cols.shape
    cout = w2d.shape[0]
    tm = _pixel_tile(m)
    return pl.pallas_call(
        _conv1_kernel,
        grid=(b, pl.cdiv(m, tm)),
        in_specs=[
            pl.BlockSpec((1, k1, tm), lambda bb, i: (bb, 0, i)),
            pl.BlockSpec((cout, k1), lambda bb, i: (0, 0)),
            pl.BlockSpec((cout, 1), lambda bb, i: (0, 0)),
        ],
        out_specs=pl.BlockSpec((1, cout, tm), lambda bb, i: (bb, 0, i)),
        out_shape=jax.ShapeDtypeStruct((b, cout, m), jnp.bfloat16),
        compiler_params=pltpu.CompilerParams(
            dimension_semantics=("parallel", "parallel")),
    )(cols, w2d.astype(jnp.float32), bias.reshape(cout, 1).astype(jnp.float32))


# ----------------------------------------------------------------------------
# Pallas kernel 2: fused backbone conv2 + depth head + metric conversion
# ----------------------------------------------------------------------------
def _fused_conv2_head_kernel(cols_ref, w0_ref, b0_ref, w1_ref, b1_ref,
                             w2_ref, b2_ref, centers_ref,
                             feats_ref, logits_ref, depth_ref, bins_ref):
    cols = cols_ref[0]                                   # (K2, tm) bf16
    # backbone conv2 (single matmul over the 9 stacked taps) + ReLU
    f = jnp.dot(w0_ref[...], cols, preferred_element_type=jnp.float32)
    f = jnp.maximum(f + b0_ref[...], 0.0)                # (Z, tm) f32
    feats_ref[0] = f

    # depth head: two 1x1 convs in channel-major orientation (no transpose)
    h = jnp.dot(w1_ref[...], f.astype(jnp.bfloat16),
                preferred_element_type=jnp.float32)
    h = jnp.maximum(h + b1_ref[...], 0.0)                # (C1, tm)
    logits = jnp.dot(w2_ref[...], h.astype(jnp.bfloat16),
                     preferred_element_type=jnp.float32) + b2_ref[...]  # (D, tm)
    logits_ref[0] = logits

    # _convert_to_metric_depth: softmax-expected bin-center depth (mm) / 1000.
    mx = jnp.max(logits, axis=0, keepdims=True)          # (1, tm)
    e = jnp.exp(logits - mx)                             # (D, tm)
    denom = jnp.sum(e, axis=0, keepdims=True)
    num = jnp.sum(e * centers_ref[...], axis=0, keepdims=True)
    depth_ref[0] = (num / denom) * (1.0 / 1000.0)        # exact divide

    # argmax over bins (first-max index -> matches torch.argmax tie-break).
    d = logits.shape[0]
    iota = jax.lax.broadcasted_iota(jnp.int32, logits.shape, 0)
    bins_ref[0] = jnp.min(jnp.where(logits == mx, iota, d), axis=0,
                          keepdims=True)


def fused_conv2_and_head(cols2, w0_2d, b0, w1, b1, w2, b2, centers):
    """cols2:(B,K2,M) bf16 channel-major conv2 patches.

    Returns batch-major / channel-major outputs:
      feats (B,Z,M) f32, logits (B,D,M) f32, depth (B,1,M) f32, bins (B,1,M) i32
    """
    b, k2, m = cols2.shape
    z = w0_2d.shape[0]
    c1 = w1.shape[0]
    d = w2.shape[0]
    tm = _pixel_tile(m)
    return pl.pallas_call(
        _fused_conv2_head_kernel,
        grid=(b, pl.cdiv(m, tm)),
        in_specs=[
            pl.BlockSpec((1, k2, tm), lambda bb, i: (bb, 0, i)),
            pl.BlockSpec((z, k2), lambda bb, i: (0, 0)),
            pl.BlockSpec((z, 1), lambda bb, i: (0, 0)),
            pl.BlockSpec((c1, z), lambda bb, i: (0, 0)),
            pl.BlockSpec((c1, 1), lambda bb, i: (0, 0)),
            pl.BlockSpec((d, c1), lambda bb, i: (0, 0)),
            pl.BlockSpec((d, 1), lambda bb, i: (0, 0)),
            pl.BlockSpec((d, 1), lambda bb, i: (0, 0)),
        ],
        out_specs=(
            pl.BlockSpec((1, z, tm), lambda bb, i: (bb, 0, i)),
            pl.BlockSpec((1, d, tm), lambda bb, i: (bb, 0, i)),
            pl.BlockSpec((1, 1, tm), lambda bb, i: (bb, 0, i)),
            pl.BlockSpec((1, 1, tm), lambda bb, i: (bb, 0, i)),
        ),
        out_shape=(
            jax.ShapeDtypeStruct((b, z, m), jnp.float32),
            jax.ShapeDtypeStruct((b, d, m), jnp.float32),
            jax.ShapeDtypeStruct((b, 1, m), jnp.float32),
            jax.ShapeDtypeStruct((b, 1, m), jnp.int32),
        ),
        compiler_params=pltpu.CompilerParams(
            dimension_semantics=("parallel", "parallel")),
    )(
        cols2,
        w0_2d.astype(jnp.bfloat16),
        b0.reshape(z, 1).astype(jnp.float32),
        w1.astype(jnp.bfloat16),
        b1.reshape(c1, 1).astype(jnp.float32),
        w2.astype(jnp.bfloat16),
        b2.reshape(d, 1).astype(jnp.float32),
        centers.reshape(d, 1).astype(jnp.float32),
    )


# ----------------------------------------------------------------------------
# JAX glue: channel-major NCHW im2col + weight flattening
# ----------------------------------------------------------------------------
def im2col_nchw(x, kh, kw, stride, pad):
    """NCHW im2col with channel-major features: (B, C*kh*kw, Ho*Wo).

    Feature index = cin*kh*kw + tap, matching a flattened OIHW conv weight.
    """
    # TODO(synk): the 3x3 patch matrix is still materialized in HBM (kh*kw
    # blow-up of the activation); forming the taps in-kernel from a DMA'd row
    # band with 1-row halo (full conv1+conv2 fusion) is not ported.
    b, c, h, w = x.shape
    xp = jnp.pad(x, ((0, 0), (0, 0), (pad, pad), (pad, pad)))
    ho = (h + 2 * pad - kh) // stride + 1
    wo = (w + 2 * pad - kw) // stride + 1
    taps = [xp[:, :, dy:dy + stride * ho:stride, dx:dx + stride * wo:stride]
            for dy in range(kh) for dx in range(kw)]
    cols = jnp.stack(taps, axis=2)                   # (B, C, kh*kw, Ho, Wo)
    return cols.reshape(b, c * kh * kw, ho * wo), ho, wo


def _oihw_to_2d(w):
    """PyTorch OIHW conv weight -> (Cout, Cin*kh*kw); matches im2col_nchw."""
    return w.reshape(w.shape[0], -1)


# ----------------------------------------------------------------------------
# Model: parameters + forward
# ----------------------------------------------------------------------------
def init_params(key):
    def conv_param(k, cout, cin, kh, kw, scale=0.05):
        kw_, kb_ = jax.random.split(k)
        w = scale * jax.random.normal(kw_, (cout, cin, kh, kw), jnp.float32)
        b = scale * jax.random.normal(kb_, (cout,), jnp.float32)
        return w, b

    k1, k2, k3, k4 = jax.random.split(key, 4)
    return {
        "vb_conv1": conv_param(k1, 16, 4, 3, 3),
        "vb_conv2": conv_param(k2, Z_CHANNELS, 16, 3, 3),
        "dh_conv1": conv_param(k3, HEAD_HIDDEN, Z_CHANNELS, 1, 1),
        "dh_conv2": conv_param(k4, NUM_BINS, HEAD_HIDDEN, 1, 1),
    }


def uniform_bin_centers(cfg):
    # TODO(synk): only 'UD' (uniform) discretization is ported; LID/SID modes
    # of convert_to_metric_depth_differentiable are not implemented.
    n = cfg["num_bins"]
    size = (cfg["depth_max"] - cfg["depth_min"]) / n
    return cfg["depth_min"] + (jnp.arange(n, dtype=jnp.float32) + 0.5) * size


def depth_completion_forward(params, x):
    """x: (B, 4, H, W) sparse LiDAR + RGB (NCHW, float32)."""
    b = x.shape[0]

    # ---- vision_backbone conv1: 3x3 s2, 4 -> 16, ReLU (Pallas kernel 1) ----
    # Kept f32 end-to-end: the sparse-depth channel holds raw mm values
    # (up to 30000) that a bf16 cast would quantize.
    wc1, bc1 = params["vb_conv1"]
    cols1, h1, w1s = im2col_nchw(x, 3, 3, 2, 1)              # (B, 36, H1*W1)
    y1 = conv1_channel_major(cols1, _oihw_to_2d(wc1), bc1)   # (B, 16, H1*W1) bf16
    y1_nchw = y1.reshape(b, wc1.shape[0], h1, w1s)           # free reshape

    # ---- fused: conv2 + depth head + metric conversion (Pallas kernel 2) ---
    wc2, bc2 = params["vb_conv2"]
    cols2, hs, ws = im2col_nchw(y1_nchw, 3, 3, 2, 1)         # (B, 144, Hs*Ws) bf16
    wh1, bh1 = params["dh_conv1"]
    wh2, bh2 = params["dh_conv2"]
    centers = uniform_bin_centers(DISCRETIZE_CFG)
    feats_cm, logits_cm, depth_cm, bins_cm = fused_conv2_and_head(
        cols2, _oihw_to_2d(wc2), bc2,
        wh1.reshape(HEAD_HIDDEN, Z_CHANNELS), bh1,
        wh2.reshape(NUM_BINS, HEAD_HIDDEN), bh2,
        centers)

    # outputs are already batch/channel-major: the reshapes below are free
    outputs = {
        "depth_preds_logits": logits_cm.reshape(b, NUM_BINS, hs, ws),
        "depth_preds_metric": depth_cm.reshape(b, hs, ws),
        "depth_preds_bins": bins_cm.reshape(b, hs, ws),
    }
    if RETURN_FEATS:
        outputs["depth_preds_feats"] = feats_cm.reshape(b, Z_CHANNELS, hs, ws)
    return outputs


# ----------------------------------------------------------------------------
# Pure-JAX reference (for the numerics self-check)
# ----------------------------------------------------------------------------
def reference_forward(params, x):
    def conv(inp, wb, stride, pad):
        w, bias = wb
        y = jax.lax.conv_general_dilated(
            inp, w, window_strides=(stride, stride),
            padding=((pad, pad), (pad, pad)),
            dimension_numbers=("NCHW", "OIHW", "NCHW"))
        return y + bias.reshape(1, -1, 1, 1)

    y1 = jnp.maximum(conv(x, params["vb_conv1"], 2, 1), 0.0)
    feats = jnp.maximum(conv(y1, params["vb_conv2"], 2, 1), 0.0)
    h = jnp.maximum(conv(feats, params["dh_conv1"], 1, 0), 0.0)
    logits = conv(h, params["dh_conv2"], 1, 0)
    centers = uniform_bin_centers(DISCRETIZE_CFG).reshape(1, -1, 1, 1)
    p = jax.nn.softmax(logits, axis=1)
    depth = jnp.sum(p * centers, axis=1) / 1000.0
    return feats, logits, depth


# ----------------------------------------------------------------------------
if __name__ == "__main__":
    key = jax.random.PRNGKey(0)
    pkey, xkey = jax.random.split(key)
    params = init_params(pkey)

    B, C, H, W = 2, 4, 16, 16
    x = jax.random.normal(xkey, (B, C, H, W), jnp.float32)

    fwd = jax.jit(depth_completion_forward)
    outputs = fwd(params, x)
    outputs = jax.tree_util.tree_map(jax.block_until_ready, outputs)

    D = NUM_BINS
    Hs, Ws = H // 4, W // 4
    assert outputs["depth_preds_logits"].shape == (B, D, Hs, Ws)
    assert outputs["depth_preds_metric"].shape == (B, Hs, Ws)
    assert outputs["depth_preds_bins"].shape == (B, Hs, Ws)
    assert outputs["depth_preds_feats"].shape == (B, Z_CHANNELS, Hs, Ws)
    assert outputs["depth_preds_bins"].dtype == jnp.int32
    assert bool(jnp.all(jnp.isfinite(outputs["depth_preds_metric"])))
    assert bool(jnp.all(outputs["depth_preds_metric"] >= 0.0))
    assert bool(jnp.all((outputs["depth_preds_bins"] >= 0)
                        & (outputs["depth_preds_bins"] < D)))

    # Numerics vs. a pure-XLA f32 reference (bf16 matmul path -> loose tols).
    ref_feats, ref_logits, ref_depth = jax.jit(reference_forward)(params, x)
    assert bool(jnp.all(jnp.abs(outputs["depth_preds_feats"] - ref_feats) < 2e-2))
    assert bool(jnp.all(jnp.abs(outputs["depth_preds_logits"] - ref_logits) < 2e-2))
    assert bool(jnp.all(jnp.abs(outputs["depth_preds_metric"] - ref_depth) < 1e-1))

    print("KERNEL_OK")
</pallas_src>

<mosaic_0001>
module attributes {stable_mosaic.version = 11 : i64} {
  func.func @_conv1_kernel(%arg0: i32, %arg1: i32, %arg2: memref<1x36x64xf32, #tpu.memory_space<vmem>>, %arg3: memref<16x36xf32, #tpu.memory_space<vmem>>, %arg4: memref<16x1xf32, #tpu.memory_space<vmem>>, %arg5: memref<1x16x64xbf16, #tpu.memory_space<vmem>>) attributes {dimension_semantics = [#tpu.dimension_semantics<parallel>, #tpu.dimension_semantics<parallel>], iteration_bounds = array<i64: 2, 1>, scalar_prefetch = 0 : i64, scratch_operands = 0 : i64, tpu.core_type = #tpu.core_type<tc>, window_params = [{transform_indices = @transform_0, window_bounds = array<i64: 1, 36, 64>}, {pipeline_mode = #tpu.pipeline_mode<synchronous>, transform_indices = @transform_1, window_bounds = array<i64: 16, 36>}, {pipeline_mode = #tpu.pipeline_mode<synchronous>, transform_indices = @transform_2, window_bounds = array<i64: 16, 1>}, {transform_indices = @transform_3, window_bounds = array<i64: 1, 16, 64>}]} {
    %c0 = arith.constant 0 : index
    %c0_0 = arith.constant 0 : index
    %0 = vector.load %arg3[%c0, %c0_0] : memref<16x36xf32, #tpu.memory_space<vmem>>, vector<16x36xf32>
    %c0_1 = arith.constant 0 : index
    %c0_2 = arith.constant 0 : index
    %c0_3 = arith.constant 0 : index
    %1 = vector.load %arg2[%c0_1, %c0_2, %c0_3] : memref<1x36x64xf32, #tpu.memory_space<vmem>>, vector<1x36x64xf32>
    %2 = vector.shape_cast %1 : vector<1x36x64xf32> to vector<36x64xf32>
    %cst = arith.constant dense<0.000000e+00> : vector<16x64xf32>
    %3 = tpu.matmul %0, %2, %cst {dimension_numbers = #tpu.dot_dimension_numbers<[1], [0], [0], [1], [0, 0, 1, 1], [], []>} : vector<16x36xf32>, vector<36x64xf32>, vector<16x64xf32> -> vector<16x64xf32>
    %c0_4 = arith.constant 0 : index
    %c0_5 = arith.constant 0 : index
    %4 = vector.load %arg4[%c0_4, %c0_5] : memref<16x1xf32, #tpu.memory_space<vmem>>, vector<16x1xf32>
    %5 = vector.broadcast %4 : vector<16x1xf32> to vector<16x64xf32>
    %6 = arith.addf %3, %5 : vector<16x64xf32>
    %cst_6 = arith.constant 0.000000e+00 : f32
    %7 = vector.broadcast %cst_6 : f32 to vector<16x64xf32>
    %8 = arith.maximumf %6, %7 : vector<16x64xf32>
    %9 = arith.truncf %8 : vector<16x64xf32> to vector<16x64xbf16>
    %c0_7 = arith.constant 0 : index
    %c0_8 = arith.constant 0 : index
    %c0_9 = arith.constant 0 : index
    %10 = vector.load %arg5[%c0_7, %c0_8, %c0_9] : memref<1x16x64xbf16, #tpu.memory_space<vmem>>, vector<1x16x64xbf16>
    %11 = vector.shape_cast %10 : vector<1x16x64xbf16> to vector<16x64xbf16>
    %12 = vector.shape_cast %9 : vector<16x64xbf16> to vector<1x16x64xbf16>
    tpu.vector_store %arg5[%c0_7, %c0_8, %c0_9], %12 {strides = array<i32>} : memref<1x16x64xbf16, #tpu.memory_space<vmem>>, vector<1x16x64xbf16>,
    return
  }
  func.func @transform_0(%arg0: i32, %arg1: i32) -> (i32, i32, i32) {
    %c0_i32 = arith.constant 0 : i32
    %c0_i32_0 = arith.constant 0 : i32
    return %arg0, %c0_i32, %arg1 : i32, i32, i32
  }
  func.func @transform_1(%arg0: i32, %arg1: i32) -> (i32, i32) {
    %c0_i32 = arith.constant 0 : i32
    %c0_i32_0 = arith.constant 0 : i32
    %c0_i32_1 = arith.constant 0 : i32
    return %c0_i32, %c0_i32_0 : i32, i32
  }
  func.func @transform_2(%arg0: i32, %arg1: i32) -> (i32, i32) {
    %c0_i32 = arith.constant 0 : i32
    %c0_i32_0 = arith.constant 0 : i32
    %c0_i32_1 = arith.constant 0 : i32
    return %c0_i32, %c0_i32_0 : i32, i32
  }
  func.func @transform_3(%arg0: i32, %arg1: i32) -> (i32, i32, i32) {
    %c0_i32 = arith.constant 0 : i32
    %c0_i32_0 = arith.constant 0 : i32
    return %arg0, %c0_i32, %arg1 : i32, i32, i32
  }
}

module attributes {stable_mosaic.version = 11 : i64} {
  func.func @_fused_conv2_head_kernel(%arg0: i32, %arg1: i32, %arg2: memref<1x144x16xbf16, #tpu.memory_space<vmem>>, %arg3: memref<32x144xbf16, #tpu.memory_space<vmem>>, %arg4: memref<32x1xf32, #tpu.memory_space<vmem>>, %arg5: memref<32x32xbf16, #tpu.memory_space<vmem>>, %arg6: memref<32x1xf32, #tpu.memory_space<vmem>>, %arg7: memref<32x32xbf16, #tpu.memory_space<vmem>>, %arg8: memref<32x1xf32, #tpu.memory_space<vmem>>, %arg9: memref<32x1xf32, #tpu.memory_space<vmem>>, %arg10: memref<1x32x16xf32, #tpu.memory_space<vmem>>, %arg11: memref<1x32x16xf32, #tpu.memory_space<vmem>>, %arg12: memref<1x1x16xf32, #tpu.memory_space<vmem>>, %arg13: memref<1x1x16xi32, #tpu.memory_space<vmem>>) attributes {dimension_semantics = [#tpu.dimension_semantics<parallel>, #tpu.dimension_semantics<parallel>], iteration_bounds = array<i64: 2, 1>, scalar_prefetch = 0 : i64, scratch_operands = 0 : i64, tpu.core_type = #tpu.core_type<tc>, window_params = [{transform_indices = @transform_0, window_bounds = array<i64: 1, 144, 16>}, {pipeline_mode = #tpu.pipeline_mode<synchronous>, transform_indices = @transform_1, window_bounds = array<i64: 32, 144>}, {pipeline_mode = #tpu.pipeline_mode<synchronous>, transform_indices = @transform_2, window_bounds = array<i64: 32, 1>}, {pipeline_mode = #tpu.pipeline_mode<synchronous>, transform_indices = @transform_3, window_bounds = array<i64: 32, 32>}, {pipeline_mode = #tpu.pipeline_mode<synchronous>, transform_indices = @transform_4, window_bounds = array<i64: 32, 1>}, {pipeline_mode = #tpu.pipeline_mode<synchronous>, transform_indices = @transform_5, window_bounds = array<i64: 32, 32>}, {pipeline_mode = #tpu.pipeline_mode<synchronous>, transform_indices = @transform_6, window_bounds = array<i64: 32, 1>}, {pipeline_mode = #tpu.pipeline_mode<synchronous>, transform_indices = @transform_7, window_bounds = array<i64: 32, 1>}, {transform_indices = @transform_8, window_bounds = array<i64: 1, 32, 16>}, {transform_indices = @transform_9, window_bounds = array<i64: 1, 32, 16>}, {transform_indices = @transform_10, window_bounds = array<i64: 1, 1, 16>}, {transform_indices = @transform_11, window_bounds = array<i64: 1, 1, 16>}]} {
    %c0 = arith.constant 0 : index
    %c0_0 = arith.constant 0 : index
    %c0_1 = arith.constant 0 : index
    %0 = vector.load %arg2[%c0, %c0_0, %c0_1] : memref<1x144x16xbf16, #tpu.memory_space<vmem>>, vector<1x144x16xbf16>
    %1 = vector.shape_cast %0 : vector<1x144x16xbf16> to vector<144x16xbf16>
    %c0_2 = arith.constant 0 : index
    %c0_3 = arith.constant 0 : index
    %2 = vector.load %arg3[%c0_2, %c0_3] : memref<32x144xbf16, #tpu.memory_space<vmem>>, vector<32x144xbf16>
    %cst = arith.constant dense<0.000000e+00> : vector<32x16xf32>
    %3 = tpu.matmul %2, %1, %cst {dimension_numbers = #tpu.dot_dimension_numbers<[1], [0], [0], [1], [0, 0, 1, 1], [], []>} : vector<32x144xbf16>, vector<144x16xbf16>, vector<32x16xf32> -> vector<32x16xf32>
    %c0_4 = arith.constant 0 : index
    %c0_5 = arith.constant 0 : index
    %4 = vector.load %arg4[%c0_4, %c0_5] : memref<32x1xf32, #tpu.memory_space<vmem>>, vector<32x1xf32>
    %5 = vector.broadcast %4 : vector<32x1xf32> to vector<32x16xf32>
    %6 = arith.addf %3, %5 : vector<32x16xf32>
    %cst_6 = arith.constant 0.000000e+00 : f32
    %7 = vector.broadcast %cst_6 : f32 to vector<32x16xf32>
    %8 = arith.maximumf %6, %7 : vector<32x16xf32>
    %c0_7 = arith.constant 0 : index
    %c0_8 = arith.constant 0 : index
    %c0_9 = arith.constant 0 : index
    %9 = vector.load %arg10[%c0_7, %c0_8, %c0_9] : memref<1x32x16xf32, #tpu.memory_space<vmem>>, vector<1x32x16xf32>
    %10 = vector.shape_cast %9 : vector<1x32x16xf32> to vector<32x16xf32>
    %11 = vector.shape_cast %8 : vector<32x16xf32> to vector<1x32x16xf32>
    tpu.vector_store %arg10[%c0_7, %c0_8, %c0_9], %11 {strides = array<i32>} : memref<1x32x16xf32, #tpu.memory_space<vmem>>, vector<1x32x16xf32>,
    %c0_10 = arith.constant 0 : index
    %c0_11 = arith.constant 0 : index
    %12 = vector.load %arg5[%c0_10, %c0_11] : memref<32x32xbf16, #tpu.memory_space<vmem>>, vector<32x32xbf16>
    %13 = arith.truncf %8 : vector<32x16xf32> to vector<32x16xbf16>
    %cst_12 = arith.constant dense<0.000000e+00> : vector<32x16xf32>
    %14 = tpu.matmul %12, %13, %cst_12 {dimension_numbers = #tpu.dot_dimension_numbers<[1], [0], [0], [1], [0, 0, 1, 1], [], []>} : vector<32x32xbf16>, vector<32x16xbf16>, vector<32x16xf32> -> vector<32x16xf32>
    %c0_13 = arith.constant 0 : index
    %c0_14 = arith.constant 0 : index
    %15 = vector.load %arg6[%c0_13, %c0_14] : memref<32x1xf32, #tpu.memory_space<vmem>>, vector<32x1xf32>
    %16 = vector.broadcast %15 : vector<32x1xf32> to vector<32x16xf32>
    %17 = arith.addf %14, %16 : vector<32x16xf32>
    %cst_15 = arith.constant 0.000000e+00 : f32
    %18 = vector.broadcast %cst_15 : f32 to vector<32x16xf32>
    %19 = arith.maximumf %17, %18 : vector<32x16xf32>
    %c0_16 = arith.constant 0 : index
    %c0_17 = arith.constant 0 : index
    %20 = vector.load %arg7[%c0_16, %c0_17] : memref<32x32xbf16, #tpu.memory_space<vmem>>, vector<32x32xbf16>
    %21 = arith.truncf %19 : vector<32x16xf32> to vector<32x16xbf16>
    %cst_18 = arith.constant dense<0.000000e+00> : vector<32x16xf32>
    %22 = tpu.matmul %20, %21, %cst_18 {dimension_numbers = #tpu.dot_dimension_numbers<[1], [0], [0], [1], [0, 0, 1, 1], [], []>} : vector<32x32xbf16>, vector<32x16xbf16>, vector<32x16xf32> -> vector<32x16xf32>
    %c0_19 = arith.constant 0 : index
    %c0_20 = arith.constant 0 : index
    %23 = vector.load %arg8[%c0_19, %c0_20] : memref<32x1xf32, #tpu.memory_space<vmem>>, vector<32x1xf32>
    %24 = vector.broadcast %23 : vector<32x1xf32> to vector<32x16xf32>
    %25 = arith.addf %22, %24 : vector<32x16xf32>
    %c0_21 = arith.constant 0 : index
    %c0_22 = arith.constant 0 : index
    %c0_23 = arith.constant 0 : index
    %26 = vector.load %arg11[%c0_21, %c0_22, %c0_23] : memref<1x32x16xf32, #tpu.memory_space<vmem>>, vector<1x32x16xf32>
    %27 = vector.shape_cast %26 : vector<1x32x16xf32> to vector<32x16xf32>
    %28 = vector.shape_cast %25 : vector<32x16xf32> to vector<1x32x16xf32>
    tpu.vector_store %arg11[%c0_21, %c0_22, %c0_23], %28 {strides = array<i32>} : memref<1x32x16xf32, #tpu.memory_space<vmem>>, vector<1x32x16xf32>,
    %cst_24 = arith.constant dense<0xFF800000> : vector<16xf32>
    %29 = vector.multi_reduction <maximumf>, %25, %cst_24 [0] : vector<32x16xf32> to vector<16xf32>
    %30 = vector.shape_cast %29 : vector<16xf32> to vector<1x16xf32>
    %31 = vector.broadcast %30 : vector<1x16xf32> to vector<32x16xf32>
    %32 = arith.subf %25, %31 : vector<32x16xf32>
    %33 = math.exp %32 : vector<32x16xf32>
    %cst_25 = arith.constant dense<0.000000e+00> : vector<16xf32>
    %34 = vector.multi_reduction <add>, %33, %cst_25 [0] : vector<32x16xf32> to vector<16xf32>
    %35 = vector.shape_cast %34 : vector<16xf32> to vector<1x16xf32>
    %c0_26 = arith.constant 0 : index
    %c0_27 = arith.constant 0 : index
    %36 = vector.load %arg9[%c0_26, %c0_27] : memref<32x1xf32, #tpu.memory_space<vmem>>, vector<32x1xf32>
    %37 = vector.broadcast %36 : vector<32x1xf32> to vector<32x16xf32>
    %38 = arith.mulf %33, %37 : vector<32x16xf32>
    %cst_28 = arith.constant dense<0.000000e+00> : vector<16xf32>
    %39 = vector.multi_reduction <add>, %38, %cst_28 [0] : vector<32x16xf32> to vector<16xf32>
    %40 = vector.shape_cast %39 : vector<16xf32> to vector<1x16xf32>
    %41 = arith.divf %40, %35 : vector<1x16xf32>
    %cst_29 = arith.constant 1.000000e-03 : f32
    %42 = vector.broadcast %cst_29 : f32 to vector<1x16xf32>
    %43 = arith.mulf %41, %42 : vector<1x16xf32>
    %c0_30 = arith.constant 0 : index
    %c0_31 = arith.constant 0 : index
    %c0_32 = arith.constant 0 : index
    %44 = vector.load %arg12[%c0_30, %c0_31, %c0_32] : memref<1x1x16xf32, #tpu.memory_space<vmem>>, vector<1x1x16xf32>
    %45 = vector.shape_cast %44 : vector<1x1x16xf32> to vector<1x16xf32>
    %46 = vector.shape_cast %43 : vector<1x16xf32> to vector<1x1x16xf32>
    tpu.vector_store %arg12[%c0_30, %c0_31, %c0_32], %46 {strides = array<i32>} : memref<1x1x16xf32, #tpu.memory_space<vmem>>, vector<1x1x16xf32>,
    %47 = tpu.iota {dimensions = array<i32: 0>} : vector<32x16xi32>
    %48 = vector.broadcast %30 : vector<1x16xf32> to vector<32x16xf32>
    %49 = arith.cmpf oeq, %25, %48 : vector<32x16xf32>
    %c32_i32 = arith.constant 32 : i32
    %50 = vector.broadcast %c32_i32 : i32 to vector<32x16xi32>
    %51 = arith.select %49, %47, %50 : vector<32x16xi1>, vector<32x16xi32>
    %cst_33 = arith.constant dense<2147483647> : vector<16xi32>
    %52 = vector.multi_reduction <minsi>, %51, %cst_33 [0] : vector<32x16xi32> to vector<16xi32>
    %53 = vector.shape_cast %52 : vector<16xi32> to vector<1x16xi32>
    %c0_34 = arith.constant 0 : index
    %c0_35 = arith.constant 0 : index
    %c0_36 = arith.constant 0 : index
    %54 = vector.load %arg13[%c0_34, %c0_35, %c0_36] : memref<1x1x16xi32, #tpu.memory_space<vmem>>, vector<1x1x16xi32>
    %55 = vector.shape_cast %54 : vector<1x1x16xi32> to vector<1x16xi32>
    %56 = vector.shape_cast %53 : vector<1x16xi32> to vector<1x1x16xi32>
    tpu.vector_store %arg13[%c0_34, %c0_35, %c0_36], %56 {strides = array<i32>} : memref<1x1x16xi32, #tpu.memory_space<vmem>>, vector<1x1x16xi32>,
    return
  }
  func.func @transform_0(%arg0: i32, %arg1: i32) -> (i32, i32, i32) {
    %c0_i32 = arith.constant 0 : i32
    %c0_i32_0 = arith.constant 0 : i32
    return %arg0, %c0_i32, %arg1 : i32, i32, i32
  }
  func.func @transform_1(%arg0: i32, %arg1: i32) -> (i32, i32) {
    %c0_i32 = arith.constant 0 : i32
    %c0_i32_0 = arith.constant 0 : i32
    %c0_i32_1 = arith.constant 0 : i32
    return %c0_i32, %c0_i32_0 : i32, i32
  }
  func.func @transform_2(%arg0: i32, %arg1: i32) -> (i32, i32) {
    %c0_i32 = arith.constant 0 : i32
    %c0_i32_0 = arith.constant 0 : i32
    %c0_i32_1 = arith.constant 0 : i32
    return %c0_i32, %c0_i32_0 : i32, i32
  }
  func.func @transform_3(%arg0: i32, %arg1: i32) -> (i32, i32) {
    %c0_i32 = arith.constant 0 : i32
    %c0_i32_0 = arith.constant 0 : i32
    %c0_i32_1 = arith.constant 0 : i32
    return %c0_i32, %c0_i32_0 : i32, i32
  }
  func.func @transform_4(%arg0: i32, %arg1: i32) -> (i32, i32) {
    %c0_i32 = arith.constant 0 : i32
    %c0_i32_0 = arith.constant 0 : i32
    %c0_i32_1 = arith.constant 0 : i32
    return %c0_i32, %c0_i32_0 : i32, i32
  }
  func.func @transform_5(%arg0: i32, %arg1: i32) -> (i32, i32) {
    %c0_i32 = arith.constant 0 : i32
    %c0_i32_0 = arith.constant 0 : i32
    %c0_i32_1 = arith.constant 0 : i32
    return %c0_i32, %c0_i32_0 : i32, i32
  }
  func.func @transform_6(%arg0: i32, %arg1: i32) -> (i32, i32) {
    %c0_i32 = arith.constant 0 : i32
    %c0_i32_0 = arith.constant 0 : i32
    %c0_i32_1 = arith.constant 0 : i32
    return %c0_i32, %c0_i32_0 : i32, i32
  }
  func.func @transform_7(%arg0: i32, %arg1: i32) -> (i32, i32) {
    %c0_i32 = arith.constant 0 : i32
    %c0_i32_0 = arith.constant 0 : i32
    %c0_i32_1 = arith.constant 0 : i32
    return %c0_i32, %c0_i32_0 : i32, i32
  }
  func.func @transform_8(%arg0: i32, %arg1: i32) -> (i32, i32, i32) {
    %c0_i32 = arith.constant 0 : i32
    %c0_i32_0 = arith.constant 0 : i32
    return %arg0, %c0_i32, %arg1 : i32, i32, i32
  }
  func.func @transform_9(%arg0: i32, %arg1: i32) -> (i32, i32, i32) {
    %c0_i32 = arith.constant 0 : i32
    %c0_i32_0 = arith.constant 0 : i32
    return %arg0, %c0_i32, %arg1 : i32, i32, i32
  }
  func.func @transform_10(%arg0: i32, %arg1: i32) -> (i32, i32, i32) {
    %c0_i32 = arith.constant 0 : i32
    %c0_i32_0 = arith.constant 0 : i32
    return %arg0, %c0_i32, %arg1 : i32, i32, i32
  }
  func.func @transform_11(%arg0: i32, %arg1: i32) -> (i32, i32, i32) {
    %c0_i32 = arith.constant 0 : i32
    %c0_i32_0 = arith.constant 0 : i32
    return %arg0, %c0_i32, %arg1 : i32, i32, i32
  }
}

</mosaic_0001>

<llo_original>
// kernel: depth_completion_forward.2
$region0: #{depth_completion_forward.2}
  #allocation0 [shape = 'u32[]', space=smem, size = 0x4, offset = 0x4, fixed_abs, tag = 'smem constant byte address 0x4 - core index']
  #allocation1 [shape = 'u32[144,128]{1,0:T(1,128)}', space=vmem, size = 0x12000, scoped, tag = 'internal scratch']
  %s0 = inlined_call_operand.vmem [shape: f32[2,36,64], index: 0, kind: input, shape index: {}]
  %s1 = inlined_call_operand.vmem [shape: f32[16,36], index: 1, kind: input, shape index: {}]
  %s2 = inlined_call_operand.vmem [shape: f32[16,1], index: 2, kind: input, shape index: {}]
  %s3 = inlined_call_operand.vmem [shape: bf16[2,16,64], index: 3, kind: output, shape index: {}]
  %s4 = sld [smem:[#allocation0]]
  $region45: #{depth_completion_forward.2} parent=0
    _
  %s6 = ssub.s32 1, %s4
  %s7 = scalar_select 0, %s6, %s4
  loop: start=0, step=1, limit=4
  $region2: #{depth_completion_forward.2} parent=0 // loop_pre_header
    _
  $region3: #{depth_completion_forward.2} parent=0 // loop_header
    %s9 = sphi 0, %s13
    %p10 = scmp.ge.s32.totalorder %s9, 4
    %s16 = sphi 0, %s28
    %s17 = sphi 0, %s24
    %s18 = sphi 0, %s16
    %s19 = sphi 0, %s17
    %s20 = sphi 0, %s18
    %s21 = sphi 0, %s19
    %s33 = sphi 0, %s35
    %s36 = sphi 0, %s33
    %s37 = sphi 0, %s36
    %s53 = sphi 0, %s37
    %s57 = sphi 0, %s57
    %s59 = sphi 0, %s57
    %s60 = sphi 0, %s59
    %s74 = sphi 0, %s60
    %s78 = sphi 0, %s78
    %s80 = sphi 0, %s78
    %s81 = sphi 0, %s80
    %s95 = sphi 0, %s81
    %s103 = sphi 0, %s105
    %s106 = sphi 0, %s103
    %s107 = sphi 0, %s106
    %s123 = sphi 0, %s107
  $region4: #{depth_completion_forward.2} parent=0 // loop_header_branch
    %12 = sbr.rel (%p10) target = $region8
  $region5: #{depth_completion_forward.2} parent=0 // loop_body
    %s14 = ssub.s32 %s9, 1
    %s15 = ssub.s32 %s9, 2
    %s22 = sadd.s32 1, %s17
    %p23 = scmp.ge.s32.totalorder %s22, 1
    %s24 = scalar_select %p23, 0, %s22
    %s25 = sadd.s32 1, %s16
    %s26 = scalar_select %p23, %s25, %s16
    %p27 = scmp.ge.s32.totalorder %s26, 2
    %s28 = scalar_select %p27, 0, %s26
    %s29 = ssub.s32 %s16, %s28
    %s30 = ssub.s32 %s17, %s24
    %s31 = sor.u32 %s29, %s30
    %p32 = scmp.eq.s32.totalorder %s31, 0
    %s34 = sadd.s32 %s33, 1
    %s35 = scalar_select %p32, %s33, %s34
    %p38 = pneg %p32
    %p39 = scmp.eq.s32.totalorder %s9, 1
    %p40 = por %p38, %p39
    %p41 = scmp.ne.s32.totalorder %s33, %s36
    %p42 = scmp.eq.s32.totalorder %s9, 0
    %p43 = por %p41, %p42
    %p44 = scmp.ne.s32.totalorder %s33, %s36
    %p45 = scmp.eq.s32.totalorder %s14, 1
    %p46 = por %p44, %p45
    %p47 = scmp.ne.s32.totalorder %s36, %s37
    %p48 = scmp.eq.s32.totalorder %s14, 0
    %p49 = por %p47, %p48
    %p50 = scmp.ne.s32.totalorder %s36, %s37
    %p51 = scmp.eq.s32.totalorder %s15, 1
    %p52 = por %p50, %p51
    %p54 = scmp.ne.s32.totalorder %s37, %s53
    %p55 = scmp.eq.s32.totalorder %s15, 0
    %p56 = por %p54, %p55
    %s58 = sadd.s32 %s57, 1
    %p61 = scmp.eq.s32.totalorder %s9, 1
    %p62 = scmp.ne.s32.totalorder %s57, %s59
    %p63 = scmp.eq.s32.totalorder %s9, 0
    %p64 = por %p62, %p63
    %p65 = scmp.ne.s32.totalorder %s57, %s59
    %p66 = scmp.eq.s32.totalorder %s14, 1
    %p67 = por %p65, %p66
    %p68 = scmp.ne.s32.totalorder %s59, %s60
    %p69 = scmp.eq.s32.totalorder %s14, 0
    %p70 = por %p68, %p69
    %p71 = scmp.ne.s32.totalorder %s59, %s60
    %p72 = scmp.eq.s32.totalorder %s15, 1
    %p73 = por %p71, %p72
    %p75 = scmp.ne.s32.totalorder %s60, %s74
    %p76 = scmp.eq.s32.totalorder %s15, 0
    %p77 = por %p75, %p76
    %s79 = sadd.s32 %s78, 1
    %p82 = scmp.eq.s32.totalorder %s9, 1
    %p83 = scmp.ne.s32.totalorder %s78, %s80
    %p84 = scmp.eq.s32.totalorder %s9, 0
    %p85 = por %p83, %p84
    %p86 = scmp.ne.s32.totalorder %s78, %s80
    %p87 = scmp.eq.s32.totalorder %s14, 1
    %p88 = por %p86, %p87
    %p89 = scmp.ne.s32.totalorder %s80, %s81
    %p90 = scmp.eq.s32.totalorder %s14, 0
    %p91 = por %p89, %p90
    %p92 = scmp.ne.s32.totalorder %s80, %s81
    %p93 = scmp.eq.s32.totalorder %s15, 1
    %p94 = por %p92, %p93
    %p96 = scmp.ne.s32.totalorder %s81, %s95
    %p97 = scmp.eq.s32.totalorder %s15, 0
    %p98 = por %p96, %p97
    %s99 = ssub.s32 %s16, %s28
    %s100 = ssub.s32 %s17, %s24
    %s101 = sor.u32 %s99, %s100
    %p102 = scmp.eq.s32.totalorder %s101, 0
    %s104 = sadd.s32 %s103, 1
    %s105 = scalar_select %p102, %s103, %s104
    %p108 = pneg %p102
    %p109 = scmp.eq.s32.totalorder %s9, 1
    %p110 = por %p108, %p109
    %p111 = scmp.ne.s32.totalorder %s103, %s106
    %p112 = scmp.eq.s32.totalorder %s9, 0
    %p113 = por %p111, %p112
    %p114 = scmp.ne.s32.totalorder %s103, %s106
    %p115 = scmp.eq.s32.totalorder %s14, 1
    %p116 = por %p114, %p115
    %p117 = scmp.ne.s32.totalorder %s106, %s107
    %p118 = scmp.eq.s32.totalorder %s14, 0
    %p119 = por %p117, %p118
    %p120 = scmp.ne.s32.totalorder %s106, %s107
    %p121 = scmp.eq.s32.totalorder %s15, 1
    %p122 = por %p120, %p121
    %p124 = scmp.ne.s32.totalorder %s107, %s123
    %p125 = scmp.eq.s32.totalorder %s15, 0
    %p126 = por %p124, %p125
    %p127 = scmp.le.s32.totalorder 1, %s9
    %p128 = scmp.lt.s32.totalorder %s9, 3
    %p129 = pnand %p127, %p128
    %p130 = pneg %p129
    // Predicated region
    $region9: #{depth_completion_forward.2} parent=5 // pred_check
      _
    $region10: #{depth_completion_forward.2} parent=5 // pred_check_branch
      %132 = sbr.rel (%p129) target = $region12
    $region11: #{depth_completion_forward.2} parent=5 // pred_region
      %s133 = ssub.s32 %s9, 1
      // Predicated region
      $region13: #{depth_completion_forward.2} parent=11 // pred_check
        %p134 = pneg %p70
      $region14: #{depth_completion_forward.2} parent=11 // pred_check_branch
        %136 = sbr.rel (%p134) target = $region16
      $region15: #{depth_completion_forward.2} parent=11 // pred_region
        _
      $region16: #{depth_completion_forward.2} parent=11 // pred_fallthru
        _
      // Predicated region
      $region17: #{depth_completion_forward.2} parent=11 // pred_check
        %p137 = pneg %p91
      $region18: #{depth_completion_forward.2} parent=11 // pred_check_branch
        %139 = sbr.rel (%p137) target = $region20
      $region19: #{depth_completion_forward.2} parent=11 // pred_region
        _
      $region20: #{depth_completion_forward.2} parent=11 // pred_fallthru
        _
    $region12: #{depth_completion_forward.2} parent=5 // pred_fallthru
      _
    %p140 = scmp.lt.s32.totalorder %s9, 2
    // Predicated region
    $region21: #{depth_completion_forward.2} parent=5 // pred_check
      %p141 = pneg %p140
    $region22: #{depth_completion_forward.2} parent=5 // pred_check_branch
      %143 = sbr.rel (%p141) target = $region24
    $region23: #{depth_completion_forward.2} parent=5 // pred_region
      // Predicated region
      $region25: #{depth_completion_forward.2} parent=23 // pred_check
        %p144 = pneg %p43
      $region26: #{depth_completion_forward.2} parent=23 // pred_check_branch
        %146 = sbr.rel (%p144) target = $region28
      $region27: #{depth_completion_forward.2} parent=23 // pred_region
        %p147 = scmp.lt.s32.totalorder %s16, 1
        %s148 = scalar_select %p147, %s16, 1
        %p149 = scmp.lt.s32.totalorder %s17, 0
        %s150 = scalar_select %p149, %s17, 0
        %s151 = smul.addr %s148, 5
        %s152 = sadd.s32 %s150, %s151
        %s153 = smul.addr %s152, 8
        %s154 = scalar_lea.vmem %s0, %s153
      $region28: #{depth_completion_forward.2} parent=23 // pred_fallthru
        _
    $region24: #{depth_completion_forward.2} parent=5 // pred_fallthru
      _
    %p155 = scmp.le.s32.totalorder 1, %s9
    %p156 = scmp.lt.s32.totalorder %s9, 3
    %p157 = pnand %p155, %p156
    %p158 = pneg %p157
    // Predicated region
    $region29: #{depth_completion_forward.2} parent=5 // pred_check
      _
    $region30: #{depth_completion_forward.2} parent=5 // pred_check_branch
      %160 = sbr.rel (%p157) target = $region32
    $region31: #{depth_completion_forward.2} parent=5 // pred_region
      %s161 = ssub.s32 %s9, 1
      %p162 = scmp.lt.s32.totalorder %s18, 1
      %s163 = scalar_select %p162, %s18, 1
      %p164 = scmp.lt.s32.totalorder %s19, 0
      %s165 = scalar_select %p164, %s19, 0
      %s166 = smul.addr %s163, 5
      %s167 = sadd.s32 %s165, %s166
      %s168 = smul.addr %s167, 8
      %s169 = scalar_lea.vmem %s0, %s168
      %p170 = pneg %p49
      %p171 = pneg %p46
      %p172 = pneg %p70
      %p173 = pneg %p67
      %p174 = pneg %p91
      %p175 = pneg %p88
      %p176 = pneg %p119
      %p177 = pneg %p116
      %p178 = scmp.lt.s32.totalorder %s18, 1
      %s179 = scalar_select %p178, %s18, 1
      %p180 = scmp.lt.s32.totalorder %s19, 0
      %s181 = scalar_select %p180, %s19, 0
      %s182 = smul.addr %s179, 2
      %s183 = sadd.s32 %s181, %s182
      %s184 = smul.addr %s183, 4
      %s185 = scalar_lea.vmem %s3, %s184
      %p186 = scmp.lt.s32.totalorder %s18, 1
      %s187 = scalar_select %p186, %s18, 1
      %p188 = scmp.lt.s32.totalorder %s19, 0
      %s189 = scalar_select %p188, %s19, 0
      %s190 = smul.addr %s187, 5
      %s191 = sadd.s32 %s189, %s190
      %s192 = smul.addr %s191, 8
      %s193 = scalar_lea.vmem %s0, %s192
      %p194 = scmp.lt.s32.totalorder %s18, 1
      %s195 = scalar_select %p194, %s18, 1
      %p196 = scmp.lt.s32.totalorder %s19, 0
      %s197 = scalar_select %p196, %s19, 0
      %s198 = smul.addr %s195, 2
      %s199 = sadd.s32 %s197, %s198
      %s200 = smul.addr %s199, 4
      %s201 = scalar_lea.vmem %s3, %s200
      %v202 = vld [vmem:[%s1] sm:$0xff]
      %v203 = vld [vmem:[%s1 + $0x8] sm:$0xff]
      %v204 = vld [vmem:[%s193] sm:$0xff]
      %v205 = vld [vmem:[%s193 + $0x8] sm:$0xff]
      %v206 = vld [vmem:[%s193 + $0x10] sm:$0xff]
      %v207 = vld [vmem:[%s193 + $0x18] sm:$0xff]
      %v208 = vld [vmem:[%s193 + $0x20] sm:$0xf]
      %v209 = vld [vmem:[%s2] sm:$0xff]
      %v210 = vld [vmem:[%s2 + $0x8] sm:$0xff]
      %212 = vset.pattern.permute.xlu0 0
      %213 = vperm.xlu0 %212, %v209
      %v214 = vpop.permute.xlu0 %213
      %217 = vset.pattern.permute.xlu0 0
      %218 = vperm.xlu0 %217, %v210
      %v219 = vpop.permute.xlu0 %218
      %vm221 = vcmask 293888
      %v223 = vsel %vm221, %v202, 0
      %v226 = vsel %vm221, %v203, 0
      %vm228 = vcmask 1043456
      %v230 = vsel %vm228, %v208, 0
      %232 = vmatprep.subr.mxu0 0.0
      %233 = vmatpush1.msra.mxu0 0.0
      %234 = vmatprep.subr.mxu0 0.0
      %235 = vmatpush1.msra.mxu0 0.0
      %236 = vmatprep.subr.mxu0 0.0
      %237 = vmatpush1.msra.mxu0 0.0
      %238 = vmatprep.subr.mxu0 0.0
      %239 = vmatpush1.msra.mxu0 0.0
      %240 = vmatprep.subr.mxu0 0.0
      %241 = vmatpush1.msra.mxu0 0.0
      %242 = vmatprep.subr.mxu0 0.0
      %243 = vmatpush1.msra.mxu0 0.0
      %244 = vmatprep.subr.mxu0 0.0
      %245 = vmatpush1.msra.mxu0 0.0
      %246 = vmatprep.subr.mxu0 0.0
      %247 = vmatpush1.msra.mxu0 0.0
      %248 = vmatprep.subr.mxu0 0.0
      %249 = vmatpush1.msra.mxu0 0.0
      %250 = vmatprep.subr.mxu0 0.0
      %251 = vmatpush1.msra.mxu0 0.0
      %252 = vmatprep.subr.mxu0 0.0
      %253 = vmatpush1.msra.mxu0 0.0
      %254 = vmatprep.subr.mxu0 0.0
      %255 = vmatpush1.msra.mxu0 %v230
      %256 = vmatprep.subr.mxu0 0.0
      %257 = vmatpush1.msra.mxu0 %v207
      %258 = vmatprep.subr.mxu0 0.0
      %259 = vmatpush1.msra.mxu0 %v206
      %260 = vmatprep.subr.mxu0 0.0
      %261 = vmatpush1.msra.mxu0 %v205
      %262 = vmatprep.subr.mxu0 0.0
      %263 = vmatpush1.msra.mxu0 %v204
      %264 = vmatprep.subr.mxu0 0.0
      %265 = vmatpush2.msra.mxu0 0.0
      %266 = vmatprep.subr.mxu0 0.0
      %267 = vmatpush2.msra.mxu0 0.0
      %268 = vmatprep.subr.mxu0 0.0
      %269 = vmatpush2.msra.mxu0 0.0
      %270 = vmatprep.subr.mxu0 0.0
      %271 = vmatpush2.msra.mxu0 0.0
      %272 = vmatprep.subr.mxu0 0.0
      %273 = vmatpush2.msra.mxu0 0.0
      %274 = vmatprep.subr.mxu0 0.0
      %275 = vmatpush2.msra.mxu0 0.0
      %276 = vmatprep.subr.mxu0 0.0
      %277 = vmatpush2.msra.mxu0 0.0
      %278 = vmatprep.subr.mxu0 0.0
      %279 = vmatpush2.msra.mxu0 0.0
      %280 = vmatprep.subr.mxu0 0.0
      %281 = vmatpush2.msra.mxu0 0.0
      %282 = vmatprep.subr.mxu0 0.0
      %283 = vmatpush2.msra.mxu0 0.0
      %284 = vmatprep.subr.mxu0 0.0
      %285 = vmatpush2.msra.mxu0 0.0
      %286 = vmatprep.subr.mxu0 0.0
      %287 = vmatpush2.msra.mxu0 0.0
      %288 = vmatprep.subr.mxu0 0.0
      %289 = vmatpush2.msra.mxu0 0.0
      %290 = vmatprep.subr.mxu0 0.0
      %291 = vmatpush2.msra.mxu0 0.0
      %292 = vmatprep.subr.mxu0 0.0
      %293 = vmatpush2.msra.mxu0 0.0
      %294 = vmatprep.subr.mxu0 0.0
      %295 = vmatpush2.msra.mxu0 0.0
      %296 = vmatprep.mubr.f32.mxu0 0.0
      %297 = vmatmul.mubr.f32.gmra.mxu0 %v223
      %v298 = vpop.f32.mrf.mxu0
      %v299 = vadd.f32 %v214, %v298
      %v300 = vpop.f32.mrf.mxu0
      %301 = vmatprep.mubr.f32.mxu0 0.0
      %302 = vmatmul.mubr.f32.gmra.mxu0 %v226
      %v303 = vpop.f32.mrf.mxu0
      %v304 = vadd.f32 %v219, %v303
      %v305 = vpop.f32.mrf.mxu0
      %306 = vdwg.mxu0
      %v307 = vmax.f32 %v299, 0.0
      %v308 = vmax.f32 %v304, 0.0
      %v309 = vpack.c.bf16 %v308, %v307
      %v311 = vunpack.c.l.b16 %v309
      %v312 = vunpack.c.h.b16 %v309
      %v313 = vpack.c.b16 %v311, %v311
      %v314 = vpack.c.b16 %v312, %v312
      %vm317 = vcmask 519168
      %318 = vst.msk [vmem:[%s201] sm:$0xf] %vm317, %v313
      %319 = vst.msk [vmem:[%s201 + $0x4] sm:$0xf] %vm317, %v314
      %p320 = scmp.lt.s32.totalorder %s18, 1
      %s321 = scalar_select %p320, %s18, 1
      %p322 = scmp.lt.s32.totalorder %s19, 0
      %s323 = scalar_select %p322, %s19, 0
      %s324 = smul.addr %s321, 2
      %s325 = sadd.s32 %s323, %s324
      %s326 = smul.addr %s325, 4
      %s327 = scalar_lea.vmem %s3, %s326
      // Predicated region
      $region33: #{depth_completion_forward.2} parent=31 // pred_check
        %p328 = pneg %p116
      $region34: #{depth_completion_forward.2} parent=31 // pred_check_branch
        %330 = sbr.rel (%p328) target = $region36
      $region35: #{depth_completion_forward.2} parent=31 // pred_region
        _
      $region36: #{depth_completion_forward.2} parent=31 // pred_fallthru
        _
    $region32: #{depth_completion_forward.2} parent=5 // pred_fallthru
      _
    %p331 = scmp.le.s32.totalorder 2, %s9
    // Predicated region
    $region37: #{depth_completion_forward.2} parent=5 // pred_check
      %p332 = pneg %p331
    $region38: #{depth_completion_forward.2} parent=5 // pred_check_branch
      %334 = sbr.rel (%p332) target = $region40
    $region39: #{depth_completion_forward.2} parent=5 // pred_region
      %s335 = ssub.s32 %s9, 2
      // Predicated region
      $region41: #{depth_completion_forward.2} parent=39 // pred_check
        %p336 = pneg %p122
      $region42: #{depth_completion_forward.2} parent=39 // pred_check_branch
        %338 = sbr.rel (%p336) target = $region44
      $region43: #{depth_completion_forward.2} parent=39 // pred_region
        %p339 = scmp.lt.s32.totalorder %s20, 1
        %s340 = scalar_select %p339, %s20, 1
        %p341 = scmp.lt.s32.totalorder %s21, 0
        %s342 = scalar_select %p341, %s21, 0
        %s343 = smul.addr %s340, 2
        %s344 = sadd.s32 %s342, %s343
        %s345 = smul.addr %s344, 4
        %s346 = scalar_lea.vmem %s3, %s345
      $region44: #{depth_completion_forward.2} parent=39 // pred_fallthru
        _
    $region40: #{depth_completion_forward.2} parent=5 // pred_fallthru
      _
  $region6: #{depth_completion_forward.2} parent=0 // loop_footer
    %s13 = sadd.s32 1, %s9
  $region7: #{depth_completion_forward.2} parent=0 // loop_footer_branch
    %8 = sbr.rel target = $region3
  $region8: #{depth_completion_forward.2} parent=0 // loop_exit
    _

// kernel: depth_completion_forward.3
$region0: #{depth_completion_forward.3}
  #allocation0 [shape = 'u32[]', space=smem, size = 0x4, offset = 0x4, fixed_abs, tag = 'smem constant byte address 0x4 - core index']
  #allocation1 [shape = 'u32[144,128]{1,0:T(1,128)}', space=vmem, size = 0x12000, scoped, tag = 'internal scratch']
  %s0 = inlined_call_operand.vmem [shape: bf16[2,144,16], index: 0, kind: input, shape index: {}]
  %s1 = inlined_call_operand.vmem [shape: bf16[32,144], index: 1, kind: input, shape index: {}]
  %s2 = inlined_call_operand.vmem [shape: f32[32,1], index: 2, kind: input, shape index: {}]
  %s3 = inlined_call_operand.vmem [shape: bf16[32,32], index: 3, kind: input, shape index: {}]
  %s4 = inlined_call_operand.vmem [shape: f32[32,1], index: 4, kind: input, shape index: {}]
  %s5 = inlined_call_operand.vmem [shape: bf16[32,32], index: 5, kind: input, shape index: {}]
  %s6 = inlined_call_operand.vmem [shape: f32[32,1], index: 6, kind: input, shape index: {}]
  %s7 = inlined_call_operand.vmem [shape: f32[32,1], index: 7, kind: input, shape index: {}]
  %s8 = inlined_call_operand.vmem [shape: f32[2,32,16], index: 8, kind: output, shape index: {0}]
  %s9 = inlined_call_operand.vmem [shape: f32[2,32,16], index: 9, kind: output, shape index: {1}]
  %s10 = inlined_call_operand.vmem [shape: f32[2,1,16], index: 10, kind: output, shape index: {2}]
  %s11 = inlined_call_operand.vmem [shape: s32[2,1,16], index: 11, kind: output, shape index: {3}]
  %12 = xla_tuple %s8, %s9, %s10, %s11
  %s13 = sld [smem:[#allocation0]]
  $region89: #{depth_completion_forward.3} parent=0
    _
  %s15 = ssub.s32 1, %s13
  %s16 = scalar_select 0, %s15, %s13
  loop: start=0, step=1, limit=4
  $region2: #{depth_completion_forward.3} parent=0 // loop_pre_header
    _
  $region3: #{depth_completion_forward.3} parent=0 // loop_header
    %s18 = sphi 0, %s22
    %p19 = scmp.ge.s32.totalorder %s18, 4
    %s25 = sphi 0, %s37
    %s26 = sphi 0, %s33
    %s27 = sphi 0, %s25
    %s28 = sphi 0, %s26
    %s29 = sphi 0, %s27
    %s30 = sphi 0, %s28
    %s42 = sphi 0, %s44
    %s45 = sphi 0, %s42
    %s46 = sphi 0, %s45
    %s62 = sphi 0, %s46
    %s66 = sphi 0, %s66
    %s68 = sphi 0, %s66
    %s69 = sphi 0, %s68
    %s83 = sphi 0, %s69
    %s87 = sphi 0, %s87
    %s89 = sphi 0, %s87
    %s90 = sphi 0, %s89
    %s104 = sphi 0, %s90
    %s108 = sphi 0, %s108
    %s110 = sphi 0, %s108
    %s111 = sphi 0, %s110
    %s125 = sphi 0, %s111
    %s129 = sphi 0, %s129
    %s131 = sphi 0, %s129
    %s132 = sphi 0, %s131
    %s146 = sphi 0, %s132
    %s150 = sphi 0, %s150
    %s152 = sphi 0, %s150
    %s153 = sphi 0, %s152
    %s167 = sphi 0, %s153
    %s171 = sphi 0, %s171
    %s173 = sphi 0, %s171
    %s174 = sphi 0, %s173
    %s188 = sphi 0, %s174
    %s192 = sphi 0, %s192
    %s194 = sphi 0, %s192
    %s195 = sphi 0, %s194
    %s209 = sphi 0, %s195
    %s217 = sphi 0, %s219
    %s220 = sphi 0, %s217
    %s221 = sphi 0, %s220
    %s237 = sphi 0, %s221
    %s245 = sphi 0, %s247
    %s248 = sphi 0, %s245
    %s249 = sphi 0, %s248
    %s265 = sphi 0, %s249
    %s273 = sphi 0, %s275
    %s276 = sphi 0, %s273
    %s277 = sphi 0, %s276
    %s293 = sphi 0, %s277
    %s301 = sphi 0, %s303
    %s304 = sphi 0, %s301
    %s305 = sphi 0, %s304
    %s321 = sphi 0, %s305
  $region4: #{depth_completion_forward.3} parent=0 // loop_header_branch
    %21 = sbr.rel (%p19) target = $region8
  $region5: #{depth_completion_forward.3} parent=0 // loop_body
    %s23 = ssub.s32 %s18, 1
    %s24 = ssub.s32 %s18, 2
    %s31 = sadd.s32 1, %s26
    %p32 = scmp.ge.s32.totalorder %s31, 1
    %s33 = scalar_select %p32, 0, %s31
    %s34 = sadd.s32 1, %s25
    %s35 = scalar_select %p32, %s34, %s25
    %p36 = scmp.ge.s32.totalorder %s35, 2
    %s37 = scalar_select %p36, 0, %s35
    %s38 = ssub.s32 %s25, %s37
    %s39 = ssub.s32 %s26, %s33
    %s40 = sor.u32 %s38, %s39
    %p41 = scmp.eq.s32.totalorder %s40, 0
    %s43 = sadd.s32 %s42, 1
    %s44 = scalar_select %p41, %s42, %s43
    %p47 = pneg %p41
    %p48 = scmp.eq.s32.totalorder %s18, 1
    %p49 = por %p47, %p48
    %p50 = scmp.ne.s32.totalorder %s42, %s45
    %p51 = scmp.eq.s32.totalorder %s18, 0
    %p52 = por %p50, %p51
    %p53 = scmp.ne.s32.totalorder %s42, %s45
    %p54 = scmp.eq.s32.totalorder %s23, 1
    %p55 = por %p53, %p54
    %p56 = scmp.ne.s32.totalorder %s45, %s46
    %p57 = scmp.eq.s32.totalorder %s23, 0
    %p58 = por %p56, %p57
    %p59 = scmp.ne.s32.totalorder %s45, %s46
    %p60 = scmp.eq.s32.totalorder %s24, 1
    %p61 = por %p59, %p60
    %p63 = scmp.ne.s32.totalorder %s46, %s62
    %p64 = scmp.eq.s32.totalorder %s24, 0
    %p65 = por %p63, %p64
    %s67 = sadd.s32 %s66, 1
    %p70 = scmp.eq.s32.totalorder %s18, 1
    %p71 = scmp.ne.s32.totalorder %s66, %s68
    %p72 = scmp.eq.s32.totalorder %s18, 0
    %p73 = por %p71, %p72
    %p74 = scmp.ne.s32.totalorder %s66, %s68
    %p75 = scmp.eq.s32.totalorder %s23, 1
    %p76 = por %p74, %p75
    %p77 = scmp.ne.s32.totalorder %s68, %s69
    %p78 = scmp.eq.s32.totalorder %s23, 0
    %p79 = por %p77, %p78
    %p80 = scmp.ne.s32.totalorder %s68, %s69
    %p81 = scmp.eq.s32.totalorder %s24, 1
    %p82 = por %p80, %p81
    %p84 = scmp.ne.s32.totalorder %s69, %s83
    %p85 = scmp.eq.s32.totalorder %s24, 0
    %p86 = por %p84, %p85
    %s88 = sadd.s32 %s87, 1
    %p91 = scmp.eq.s32.totalorder %s18, 1
    %p92 = scmp.ne.s32.totalorder %s87, %s89
    %p93 = scmp.eq.s32.totalorder %s18, 0
    %p94 = por %p92, %p93
    %p95 = scmp.ne.s32.totalorder %s87, %s89
    %p96 = scmp.eq.s32.totalorder %s23, 1
    %p97 = por %p95, %p96
    %p98 = scmp.ne.s32.totalorder %s89, %s90
    %p99 = scmp.eq.s32.totalorder %s23, 0
    %p100 = por %p98, %p99
    %p101 = scmp.ne.s32.totalorder %s89, %s90
    %p102 = scmp.eq.s32.totalorder %s24, 1
    %p103 = por %p101, %p102
    %p105 = scmp.ne.s32.totalorder %s90, %s104
    %p106 = scmp.eq.s32.totalorder %s24, 0
    %p107 = por %p105, %p106
    %s109 = sadd.s32 %s108, 1
    %p112 = scmp.eq.s32.totalorder %s18, 1
    %p113 = scmp.ne.s32.totalorder %s108, %s110
    %p114 = scmp.eq.s32.totalorder %s18, 0
    %p115 = por %p113, %p114
    %p116 = scmp.ne.s32.totalorder %s108, %s110
    %p117 = scmp.eq.s32.totalorder %s23, 1
    %p118 = por %p116, %p117
    %p119 = scmp.ne.s32.totalorder %s110, %s111
    %p120 = scmp.eq.s32.totalorder %s23, 0
    %p121 = por %p119, %p120
    %p122 = scmp.ne.s32.totalorder %s110, %s111
    %p123 = scmp.eq.s32.totalorder %s24, 1
    %p124 = por %p122, %p123
    %p126 = scmp.ne.s32.totalorder %s111, %s125
    %p127 = scmp.eq.s32.totalorder %s24, 0
    %p128 = por %p126, %p127
    %s130 = sadd.s32 %s129, 1
    %p133 = scmp.eq.s32.totalorder %s18, 1
    %p134 = scmp.ne.s32.totalorder %s129, %s131
    %p135 = scmp.eq.s32.totalorder %s18, 0
    %p136 = por %p134, %p135
    %p137 = scmp.ne.s32.totalorder %s129, %s131
    %p138 = scmp.eq.s32.totalorder %s23, 1
    %p139 = por %p137, %p138
    %p140 = scmp.ne.s32.totalorder %s131, %s132
    %p141 = scmp.eq.s32.totalorder %s23, 0
    %p142 = por %p140, %p141
    %p143 = scmp.ne.s32.totalorder %s131, %s132
    %p144 = scmp.eq.s32.totalorder %s24, 1
    %p145 = por %p143, %p144
    %p147 = scmp.ne.s32.totalorder %s132, %s146
    %p148 = scmp.eq.s32.totalorder %s24, 0
    %p149 = por %p147, %p148
    %s151 = sadd.s32 %s150, 1
    %p154 = scmp.eq.s32.totalorder %s18, 1
    %p155 = scmp.ne.s32.totalorder %s150, %s152
    %p156 = scmp.eq.s32.totalorder %s18, 0
    %p157 = por %p155, %p156
    %p158 = scmp.ne.s32.totalorder %s150, %s152
    %p159 = scmp.eq.s32.totalorder %s23, 1
    %p160 = por %p158, %p159
    %p161 = scmp.ne.s32.totalorder %s152, %s153
    %p162 = scmp.eq.s32.totalorder %s23, 0
    %p163 = por %p161, %p162
    %p164 = scmp.ne.s32.totalorder %s152, %s153
    %p165 = scmp.eq.s32.totalorder %s24, 1
    %p166 = por %p164, %p165
    %p168 = scmp.ne.s32.totalorder %s153, %s167
    %p169 = scmp.eq.s32.totalorder %s24, 0
    %p170 = por %p168, %p169
    %s172 = sadd.s32 %s171, 1
    %p175 = scmp.eq.s32.totalorder %s18, 1
    %p176 = scmp.ne.s32.totalorder %s171, %s173
    %p177 = scmp.eq.s32.totalorder %s18, 0
    %p178 = por %p176, %p177
    %p179 = scmp.ne.s32.totalorder %s171, %s173
    %p180 = scmp.eq.s32.totalorder %s23, 1
    %p181 = por %p179, %p180
    %p182 = scmp.ne.s32.totalorder %s173, %s174
    %p183 = scmp.eq.s32.totalorder %s23, 0
    %p184 = por %p182, %p183
    %p185 = scmp.ne.s32.totalorder %s173, %s174
    %p186 = scmp.eq.s32.totalorder %s24, 1
    %p187 = por %p185, %p186
    %p189 = scmp.ne.s32.totalorder %s174, %s188
    %p190 = scmp.eq.s32.totalorder %s24, 0
    %p191 = por %p189, %p190
    %s193 = sadd.s32 %s192, 1
    %p196 = scmp.eq.s32.totalorder %s18, 1
    %p197 = scmp.ne.s32.totalorder %s192, %s194
    %p198 = scmp.eq.s32.totalorder %s18, 0
    %p199 = por %p197, %p198
    %p200 = scmp.ne.s32.totalorder %s192, %s194
    %p201 = scmp.eq.s32.totalorder %s23, 1
    %p202 = por %p200, %p201
    %p203 = scmp.ne.s32.totalorder %s194, %s195
    %p204 = scmp.eq.s32.totalorder %s23, 0
    %p205 = por %p203, %p204
    %p206 = scmp.ne.s32.totalorder %s194, %s195
    %p207 = scmp.eq.s32.totalorder %s24, 1
    %p208 = por %p206, %p207
    %p210 = scmp.ne.s32.totalorder %s195, %s209
    %p211 = scmp.eq.s32.totalorder %s24, 0
    %p212 = por %p210, %p211
    %s213 = ssub.s32 %s25, %s37
    %s214 = ssub.s32 %s26, %s33
    %s215 = sor.u32 %s213, %s214
    %p216 = scmp.eq.s32.totalorder %s215, 0
    %s218 = sadd.s32 %s217, 1
    %s219 = scalar_select %p216, %s217, %s218
    %p222 = pneg %p216
    %p223 = scmp.eq.s32.totalorder %s18, 1
    %p224 = por %p222, %p223
    %p225 = scmp.ne.s32.totalorder %s217, %s220
    %p226 = scmp.eq.s32.totalorder %s18, 0
    %p227 = por %p225, %p226
    %p228 = scmp.ne.s32.totalorder %s217, %s220
    %p229 = scmp.eq.s32.totalorder %s23, 1
    %p230 = por %p228, %p229
    %p231 = scmp.ne.s32.totalorder %s220, %s221
    %p232 = scmp.eq.s32.totalorder %s23, 0
    %p233 = por %p231, %p232
    %p234 = scmp.ne.s32.totalorder %s220, %s221
    %p235 = scmp.eq.s32.totalorder %s24, 1
    %p236 = por %p234, %p235
    %p238 = scmp.ne.s32.totalorder %s221, %s237
    %p239 = scmp.eq.s32.totalorder %s24, 0
    %p240 = por %p238, %p239
    %s241 = ssub.s32 %s25, %s37
    %s242 = ssub.s32 %s26, %s33
    %s243 = sor.u32 %s241, %s242
    %p244 = scmp.eq.s32.totalorder %s243, 0
    %s246 = sadd.s32 %s245, 1
    %s247 = scalar_select %p244, %s245, %s246
    %p250 = pneg %p244
    %p251 = scmp.eq.s32.totalorder %s18, 1
    %p252 = por %p250, %p251
    %p253 = scmp.ne.s32.totalorder %s245, %s248
    %p254 = scmp.eq.s32.totalorder %s18, 0
    %p255 = por %p253, %p254
    %p256 = scmp.ne.s32.totalorder %s245, %s248
    %p257 = scmp.eq.s32.totalorder %s23, 1
    %p258 = por %p256, %p257
    %p259 = scmp.ne.s32.totalorder %s248, %s249
    %p260 = scmp.eq.s32.totalorder %s23, 0
    %p261 = por %p259, %p260
    %p262 = scmp.ne.s32.totalorder %s248, %s249
    %p263 = scmp.eq.s32.totalorder %s24, 1
    %p264 = por %p262, %p263
    %p266 = scmp.ne.s32.totalorder %s249, %s265
    %p267 = scmp.eq.s32.totalorder %s24, 0
    %p268 = por %p266, %p267
    %s269 = ssub.s32 %s25, %s37
    %s270 = ssub.s32 %s26, %s33
    %s271 = sor.u32 %s269, %s270
    %p272 = scmp.eq.s32.totalorder %s271, 0
    %s274 = sadd.s32 %s273, 1
    %s275 = scalar_select %p272, %s273, %s274
    %p278 = pneg %p272
    %p279 = scmp.eq.s32.totalorder %s18, 1
    %p280 = por %p278, %p279
    %p281 = scmp.ne.s32.totalorder %s273, %s276
    %p282 = scmp.eq.s32.totalorder %s18, 0
    %p283 = por %p281, %p282
    %p284 = scmp.ne.s32.totalorder %s273, %s276
    %p285 = scmp.eq.s32.totalorder %s23, 1
    %p286 = por %p284, %p285
    %p287 = scmp.ne.s32.totalorder %s276, %s277
    %p288 = scmp.eq.s32.totalorder %s23, 0
    %p289 = por %p287, %p288
    %p290 = scmp.ne.s32.totalorder %s276, %s277
    %p291 = scmp.eq.s32.totalorder %s24, 1
    %p292 = por %p290, %p291
    %p294 = scmp.ne.s32.totalorder %s277, %s293
    %p295 = scmp.eq.s32.totalorder %s24, 0
    %p296 = por %p294, %p295
    %s297 = ssub.s32 %s25, %s37
    %s298 = ssub.s32 %s26, %s33
    %s299 = sor.u32 %s297, %s298
    %p300 = scmp.eq.s32.totalorder %s299, 0
    %s302 = sadd.s32 %s301, 1
    %s303 = scalar_select %p300, %s301, %s302
    %p306 = pneg %p300
    %p307 = scmp.eq.s32.totalorder %s18, 1
    %p308 = por %p306, %p307
    %p309 = scmp.ne.s32.totalorder %s301, %s304
    %p310 = scmp.eq.s32.totalorder %s18, 0
    %p311 = por %p309, %p310
    %p312 = scmp.ne.s32.totalorder %s301, %s304
    %p313 = scmp.eq.s32.totalorder %s23, 1
    %p314 = por %p312, %p313
    %p315 = scmp.ne.s32.totalorder %s304, %s305
    %p316 = scmp.eq.s32.totalorder %s23, 0
    %p317 = por %p315, %p316
    %p318 = scmp.ne.s32.totalorder %s304, %s305
    %p319 = scmp.eq.s32.totalorder %s24, 1
    %p320 = por %p318, %p319
    %p322 = scmp.ne.s32.totalorder %s305, %s321
    %p323 = scmp.eq.s32.totalorder %s24, 0
    %p324 = por %p322, %p323
    %p325 = scmp.le.s32.totalorder 1, %s18
    %p326 = scmp.lt.s32.totalorder %s18, 3
    %p327 = pnand %p325, %p326
    %p328 = pneg %p327
    // Predicated region
    $region9: #{depth_completion_forward.3} parent=5 // pred_check
      _
    $region10: #{depth_completion_forward.3} parent=5 // pred_check_branch
      %330 = sbr.rel (%p327) target = $region12
    $region11: #{depth_completion_forward.3} parent=5 // pred_region
      %s331 = ssub.s32 %s18, 1
      // Predicated region
      $region13: #{depth_completion_forward.3} parent=11 // pred_check
        %p332 = pneg %p79
      $region14: #{depth_completion_forward.3} parent=11 // pred_check_branch
        %334 = sbr.rel (%p332) target = $region16
      $region15: #{depth_completion_forward.3} parent=11 // pred_region
        _
      $region16: #{depth_completion_forward.3} parent=11 // pred_fallthru
        _
      // Predicated region
      $region17: #{depth_completion_forward.3} parent=11 // pred_check
        %p335 = pneg %p100
      $region18: #{depth_completion_forward.3} parent=11 // pred_check_branch
        %337 = sbr.rel (%p335) target = $region20
      $region19: #{depth_completion_forward.3} parent=11 // pred_region
        _
      $region20: #{depth_completion_forward.3} parent=11 // pred_fallthru
        _
      // Predicated region
      $region21: #{depth_completion_forward.3} parent=11 // pred_check
        %p338 = pneg %p121
      $region22: #{depth_completion_forward.3} parent=11 // pred_check_branch
        %340 = sbr.rel (%p338) target = $region24
      $region23: #{depth_completion_forward.3} parent=11 // pred_region
        _
      $region24: #{depth_completion_forward.3} parent=11 // pred_fallthru
        _
      // Predicated region
      $region25: #{depth_completion_forward.3} parent=11 // pred_check
        %p341 = pneg %p142
      $region26: #{depth_completion_forward.3} parent=11 // pred_check_branch
        %343 = sbr.rel (%p341) target = $region28
      $region27: #{depth_completion_forward.3} parent=11 // pred_region
        _
      $region28: #{depth_completion_forward.3} parent=11 // pred_fallthru
        _
      // Predicated region
      $region29: #{depth_completion_forward.3} parent=11 // pred_check
        %p344 = pneg %p163
      $region30: #{depth_completion_forward.3} parent=11 // pred_check_branch
        %346 = sbr.rel (%p344) target = $region32
      $region31: #{depth_completion_forward.3} parent=11 // pred_region
        _
      $region32: #{depth_completion_forward.3} parent=11 // pred_fallthru
        _
      // Predicated region
      $region33: #{depth_completion_forward.3} parent=11 // pred_check
        %p347 = pneg %p184
      $region34: #{depth_completion_forward.3} parent=11 // pred_check_branch
        %349 = sbr.rel (%p347) target = $region36
      $region35: #{depth_completion_forward.3} parent=11 // pred_region
        _
      $region36: #{depth_completion_forward.3} parent=11 // pred_fallthru
        _
      // Predicated region
      $region37: #{depth_completion_forward.3} parent=11 // pred_check
        %p350 = pneg %p205
      $region38: #{depth_completion_forward.3} parent=11 // pred_check_branch
        %352 = sbr.rel (%p350) target = $region40
      $region39: #{depth_completion_forward.3} parent=11 // pred_region
        _
      $region40: #{depth_completion_forward.3} parent=11 // pred_fallthru
        _
    $region12: #{depth_completion_forward.3} parent=5 // pred_fallthru
      _
    %p353 = scmp.lt.s32.totalorder %s18, 2
    // Predicated region
    $region41: #{depth_completion_forward.3} parent=5 // pred_check
      %p354 = pneg %p353
    $region42: #{depth_completion_forward.3} parent=5 // pred_check_branch
      %356 = sbr.rel (%p354) target = $region44
    $region43: #{depth_completion_forward.3} parent=5 // pred_region
      // Predicated region
      $region45: #{depth_completion_forward.3} parent=43 // pred_check
        %p357 = pneg %p52
      $region46: #{depth_completion_forward.3} parent=43 // pred_check_branch
        %359 = sbr.rel (%p357) target = $region48
      $region47: #{depth_completion_forward.3} parent=43 // pred_region
        %p360 = scmp.lt.s32.totalorder %s25, 1
        %s361 = scalar_select %p360, %s25, 1
        %p362 = scmp.lt.s32.totalorder %s26, 0
        %s363 = scalar_select %p362, %s26, 0
        %s364 = smul.addr %s361, 18
        %s365 = sadd.s32 %s363, %s364
        %s366 = smul.addr %s365, 4
        %s367 = scalar_lea.vmem %s0, %s366
      $region48: #{depth_completion_forward.3} parent=43 // pred_fallthru
        _
    $region44: #{depth_completion_forward.3} parent=5 // pred_fallthru
      _
    %p368 = scmp.le.s32.totalorder 1, %s18
    %p369 = scmp.lt.s32.totalorder %s18, 3
    %p370 = pnand %p368, %p369
    %p371 = pneg %p370
    // Predicated region
    $region49: #{depth_completion_forward.3} parent=5 // pred_check
      _
    $region50: #{depth_completion_forward.3} parent=5 // pred_check_branch
      %373 = sbr.rel (%p370) target = $region52
    $region51: #{depth_completion_forward.3} parent=5 // pred_region
      %s374 = ssub.s32 %s18, 1
      %p375 = scmp.lt.s32.totalorder %s27, 1
      %s376 = scalar_select %p375, %s27, 1
      %p377 = scmp.lt.s32.totalorder %s28, 0
      %s378 = scalar_select %p377, %s28, 0
      %s379 = smul.addr %s376, 18
      %s380 = sadd.s32 %s378, %s379
      %s381 = smul.addr %s380, 4
      %s382 = scalar_lea.vmem %s0, %s381
      %p383 = pneg %p58
      %p384 = pneg %p55
      %p385 = pneg %p79
      %p386 = pneg %p76
      %p387 = pneg %p100
      %p388 = pneg %p97
      %p389 = pneg %p121
      %p390 = pneg %p118
      %p391 = pneg %p142
      %p392 = pneg %p139
      %p393 = pneg %p163
      %p394 = pneg %p160
      %p395 = pneg %p184
      %p396 = pneg %p181
      %p397 = pneg %p205
      %p398 = pneg %p202
      %p399 = pneg %p233
      %p400 = pneg %p230
      %p401 = scmp.lt.s32.totalorder %s27, 1
      %s402 = scalar_select %p401, %s27, 1
      %p403 = scmp.lt.s32.totalorder %s28, 0
      %s404 = scalar_select %p403, %s28, 0
      %s405 = smul.addr %s402, 4
      %s406 = sadd.s32 %s404, %s405
      %s407 = smul.addr %s406, 8
      %s408 = scalar_lea.vmem %s8, %s407
      %p409 = pneg %p261
      %p410 = pneg %p258
      %p411 = scmp.lt.s32.totalorder %s27, 1
      %s412 = scalar_select %p411, %s27, 1
      %p413 = scmp.lt.s32.totalorder %s28, 0
      %s414 = scalar_select %p413, %s28, 0
      %s415 = smul.addr %s412, 4
      %s416 = sadd.s32 %s414, %s415
      %s417 = smul.addr %s416, 8
      %s418 = scalar_lea.vmem %s9, %s417
      %p419 = pneg %p289
      %p420 = pneg %p286
      %p421 = scmp.lt.s32.totalorder %s27, 1
      %s422 = scalar_select %p421, %s27, 1
      %p423 = scmp.lt.s32.totalorder %s28, 0
      %s424 = scalar_select %p423, %s28, 0
      %s425 = sadd.s32 %s424, %s422
      %s426 = scalar_lea.vmem %s10, %s425
      %p427 = pneg %p317
      %p428 = pneg %p314
      %p429 = scmp.lt.s32.totalorder %s27, 1
      %s430 = scalar_select %p429, %s27, 1
      %p431 = scmp.lt.s32.totalorder %s28, 0
      %s432 = scalar_select %p431, %s28, 0
      %s433 = sadd.s32 %s432, %s430
      %s434 = scalar_lea.vmem %s11, %s433
      %p435 = scmp.lt.s32.totalorder %s27, 1
      %s436 = scalar_select %p435, %s27, 1
      %p437 = scmp.lt.s32.totalorder %s28, 0
      %s438 = scalar_select %p437, %s28, 0
      %s439 = smul.addr %s436, 18
      %s440 = sadd.s32 %s438, %s439
      %s441 = smul.addr %s440, 4
      %s442 = scalar_lea.vmem %s0, %s441
      %p443 = scmp.lt.s32.totalorder %s27, 1
      %s444 = scalar_select %p443, %s27, 1
      %p445 = scmp.lt.s32.totalorder %s28, 0
      %s446 = scalar_select %p445, %s28, 0
      %s447 = smul.addr %s444, 4
      %s448 = sadd.s32 %s446, %s447
      %s449 = smul.addr %s448, 8
      %s450 = scalar_lea.vmem %s8, %s449
      %p451 = scmp.lt.s32.totalorder %s27, 1
      %s452 = scalar_select %p451, %s27, 1
      %p453 = scmp.lt.s32.totalorder %s28, 0
      %s454 = scalar_select %p453, %s28, 0
      %s455 = smul.addr %s452, 4
      %s456 = sadd.s32 %s454, %s455
      %s457 = smul.addr %s456, 8
      %s458 = scalar_lea.vmem %s9, %s457
      %p459 = scmp.lt.s32.totalorder %s27, 1
      %s460 = scalar_select %p459, %s27, 1
      %p461 = scmp.lt.s32.totalorder %s28, 0
      %s462 = scalar_select %p461, %s28, 0
      %s463 = sadd.s32 %s462, %s460
      %s464 = scalar_lea.vmem %s10, %s463
      %p465 = scmp.lt.s32.totalorder %s27, 1
      %s466 = scalar_select %p465, %s27, 1
      %p467 = scmp.lt.s32.totalorder %s28, 0
      %s468 = scalar_select %p467, %s28, 0
      %s469 = sadd.s32 %s468, %s466
      %s470 = scalar_lea.vmem %s11, %s469
      %v472 = vld [vmem:[%s442] sm:$0xf]
      %v473 = vld [vmem:[%s442 + $0x4] sm:$0xf]
      %v474 = vld [vmem:[%s442 + $0x8] sm:$0xf]
      %v475 = vld [vmem:[%s442 + $0xc] sm:$0xf]
      %v476 = vld [vmem:[%s442 + $0x10] sm:$0xf]
      %v477 = vld [vmem:[%s442 + $0x14] sm:$0xf]
      %v478 = vld [vmem:[%s442 + $0x18] sm:$0xf]
      %v479 = vld [vmem:[%s442 + $0x1c] sm:$0xf]
      %v480 = vld [vmem:[%s442 + $0x20] sm:$0xf]
      %v481 = vld [vmem:[%s442 + $0x24] sm:$0xf]
      %v482 = vld [vmem:[%s442 + $0x28] sm:$0xf]
      %v483 = vld [vmem:[%s442 + $0x2c] sm:$0xf]
      %v484 = vld [vmem:[%s442 + $0x30] sm:$0xf]
      %v485 = vld [vmem:[%s442 + $0x34] sm:$0xf]
      %v486 = vld [vmem:[%s442 + $0x38] sm:$0xf]
      %v487 = vld [vmem:[%s442 + $0x3c] sm:$0xf]
      %v488 = vld [vmem:[%s442 + $0x40] sm:$0xf]
      %v489 = vld [vmem:[%s442 + $0x44] sm:$0xf]
      %v490 = vld [vmem:[%s1] sm:$0xff]
      %v491 = vld [vmem:[%s1 + $0x8] sm:$0xff]
      %v492 = vld [vmem:[%s1 + $0x10] sm:$0xff]
      %v493 = vld [vmem:[%s1 + $0x18] sm:$0xff]
      %v494 = vld [vmem:[%s2] sm:$0xff]
      %v495 = vld [vmem:[%s2 + $0x8] sm:$0xff]
      %v496 = vld [vmem:[%s2 + $0x10] sm:$0xff]
      %v497 = vld [vmem:[%s2 + $0x18] sm:$0xff]
      %499 = vset.pattern.permute.xlu0 0
      %500 = vperm.xlu0 %499, %v494
      %v501 = vpop.permute.xlu0 %500
      %504 = vset.pattern.permute.xlu0 0
      %505 = vperm.xlu0 %504, %v495
      %v506 = vpop.permute.xlu0 %505
      %509 = vset.pattern.permute.xlu0 0
      %510 = vperm.xlu0 %509, %v496
      %v511 = vpop.permute.xlu0 %510
      %514 = vset.pattern.permute.xlu0 0
      %515 = vperm.xlu0 %514, %v497
      %v516 = vpop.permute.xlu0 %515
      %v522 = vunpack.c.l.b16 %v490
      %v523 = vunpack.c.h.b16 %v490
      %v524 = vunpack.c.l.b16 %v491
      %v525 = vunpack.c.h.b16 %v491
      %v526 = vunpack.c.l.b16 %v492
      %v527 = vunpack.c.h.b16 %v492
      %v528 = vunpack.c.l.b16 %v493
      %v529 = vunpack.c.h.b16 %v493
      %v530 = vpack.c.b16 %v524, %v522
      %v531 = vpack.c.b16 %v525, %v523
      %v532 = vpack.c.b16 %v528, %v526
      %v533 = vpack.c.b16 %v529, %v527
      %v554 = vunpack.c.l.b16 %v472
      %v555 = vunpack.c.l.b16 %v473
      %v556 = vunpack.c.l.b16 %v474
      %v557 = vunpack.c.l.b16 %v475
      %v558 = vunpack.c.l.b16 %v476
      %v559 = vunpack.c.l.b16 %v477
      %v560 = vunpack.c.l.b16 %v478
      %v561 = vunpack.c.l.b16 %v479
      %v562 = vunpack.c.l.b16 %v480
      %v563 = vunpack.c.l.b16 %v481
      %v564 = vunpack.c.l.b16 %v482
      %v565 = vunpack.c.l.b16 %v483
      %v566 = vunpack.c.l.b16 %v484
      %v567 = vunpack.c.l.b16 %v485
      %v568 = vunpack.c.l.b16 %v486
      %v569 = vunpack.c.l.b16 %v487
      %v570 = vunpack.c.l.b16 %v488
      %v571 = vunpack.c.l.b16 %v489
      %v572 = vpack.c.b16 %v555, %v554
      %v573 = vpack.c.b16 %v557, %v556
      %v574 = vpack.c.b16 %v559, %v558
      %v575 = vpack.c.b16 %v561, %v560
      %v576 = vpack.c.b16 %v563, %v562
      %v577 = vpack.c.b16 %v565, %v564
      %v578 = vpack.c.b16 %v567, %v566
      %v579 = vpack.c.b16 %v569, %v568
      %v580 = vpack.c.b16 %v571, %v570
      %vm590 = vcmask 130048
      %v592 = vsel %vm590, %v531, 0
      %v595 = vsel %vm590, %v533, 0
      %597 = vmatprep.subr.bf16.mxu0 0
      %598 = vmatpush1.bf16.msra.mxu0 %v579
      %599 = vmatprep.subr.bf16.mxu0 0
      %600 = vmatpush1.bf16.msra.mxu0 %v578
      %601 = vmatprep.subr.bf16.mxu0 0
      %602 = vmatpush1.bf16.msra.mxu0 %v577
      %603 = vmatprep.subr.bf16.mxu0 0
      %604 = vmatpush1.bf16.msra.mxu0 %v576
      %605 = vmatprep.subr.bf16.mxu0 0
      %606 = vmatpush1.bf16.msra.mxu0 %v575
      %607 = vmatprep.subr.bf16.mxu0 0
      %608 = vmatpush1.bf16.msra.mxu0 %v574
      %609 = vmatprep.subr.bf16.mxu0 0
      %610 = vmatpush1.bf16.msra.mxu0 %v573
      %611 = vmatprep.subr.bf16.mxu0 0
      %612 = vmatpush1.bf16.msra.mxu0 %v572
      %613 = vmatprep.subr.bf16.mxu0 0
      %614 = vmatpush2.bf16.msra.mxu0 0
      %615 = vmatprep.subr.bf16.mxu0 0
      %616 = vmatpush2.bf16.msra.mxu0 0
      %617 = vmatprep.subr.bf16.mxu0 0
      %618 = vmatpush2.bf16.msra.mxu0 0
      %619 = vmatprep.subr.bf16.mxu0 0
      %620 = vmatpush2.bf16.msra.mxu0 0
      %621 = vmatprep.subr.bf16.mxu0 0
      %622 = vmatpush2.bf16.msra.mxu0 0
      %623 = vmatprep.subr.bf16.mxu0 0
      %624 = vmatpush2.bf16.msra.mxu0 0
      %625 = vmatprep.subr.bf16.mxu0 0
      %626 = vmatpush2.bf16.msra.mxu0 0
      %627 = vmatprep.subr.bf16.mxu0 0
      %628 = vmatpush2.bf16.msra.mxu0 %v580
      %629 = vmatprep.mubr.bf16.mxu0 %v592
      %630 = vmatmul.mubr.bf16.gmra.mxu0 %v530
      %v631 = vpop.f32.mrf.mxu0
      %v632 = vadd.f32 %v501, %v631
      %v633 = vpop.f32.mrf.mxu0
      %v634 = vpop.f32.mrf.mxu0
      %v635 = vadd.f32 %v506, %v634
      %v636 = vpop.f32.mrf.mxu0
      %637 = vmatprep.mubr.bf16.mxu0 %v595
      %638 = vmatmul.mubr.bf16.gmra.mxu0 %v532
      %v639 = vpop.f32.mrf.mxu0
      %v640 = vadd.f32 %v511, %v639
      %v641 = vpop.f32.mrf.mxu0
      %v642 = vpop.f32.mrf.mxu0
      %v643 = vadd.f32 %v516, %v642
      %v644 = vpop.f32.mrf.mxu0
      %645 = vdwg.mxu0
      %v646 = vmax.f32 %v632, 0.0
      %v647 = vmax.f32 %v635, 0.0
      %v648 = vmax.f32 %v640, 0.0
      %v649 = vmax.f32 %v643, 0.0
      %650 = vst.msk [vmem:[%s450] sm:$0xff] %vm590, %v646
      %651 = vst.msk [vmem:[%s450 + $0x8] sm:$0xff] %vm590, %v647
      %652 = vst.msk [vmem:[%s450 + $0x10] sm:$0xff] %vm590, %v648
      %653 = vst.msk [vmem:[%s450 + $0x18] sm:$0xff] %vm590, %v649
      %v654 = vld [vmem:[%s3] sm:$0xf]
      %v655 = vld [vmem:[%s3 + $0x4] sm:$0xf]
      %v656 = vld [vmem:[%s3 + $0x8] sm:$0xf]
      %v657 = vld [vmem:[%s3 + $0xc] sm:$0xf]
      %v658 = vpack.c.bf16 %v647, %v646
      %v659 = vpack.c.bf16 %v649, %v648
      %v660 = vld [vmem:[%s4] sm:$0xff]
      %v661 = vld [vmem:[%s4 + $0x8] sm:$0xff]
      %v662 = vld [vmem:[%s4 + $0x10] sm:$0xff]
      %v663 = vld [vmem:[%s4 + $0x18] sm:$0xff]
      %665 = vset.pattern.permute.xlu0 0
      %666 = vperm.xlu0 %665, %v660
      %v667 = vpop.permute.xlu0 %666
      %670 = vset.pattern.permute.xlu0 0
      %671 = vperm.xlu0 %670, %v661
      %v672 = vpop.permute.xlu0 %671
      %675 = vset.pattern.permute.xlu0 0
      %676 = vperm.xlu0 %675, %v662
      %v677 = vpop.permute.xlu0 %676
      %680 = vset.pattern.permute.xlu0 0
      %681 = vperm.xlu0 %680, %v663
      %v682 = vpop.permute.xlu0 %681
      %v688 = vunpack.c.l.b16 %v654
      %v689 = vunpack.c.l.b16 %v655
      %v690 = vunpack.c.l.b16 %v656
      %v691 = vunpack.c.l.b16 %v657
      %v692 = vpack.c.b16 %v689, %v688
      %v693 = vpack.c.b16 %v691, %v690
      %vm694 = vcmask 261120
      %v696 = vsel %vm694, %v692, 0
      %v699 = vsel %vm694, %v693, 0
      %701 = vmatprep.subr.bf16.mxu0 0
      %702 = vmatpush1.bf16.msra.mxu0 0
      %703 = vmatprep.subr.bf16.mxu0 0
      %704 = vmatpush1.bf16.msra.mxu0 0
      %705 = vmatprep.subr.bf16.mxu0 0
      %706 = vmatpush1.bf16.msra.mxu0 0
      %707 = vmatprep.subr.bf16.mxu0 0
      %708 = vmatpush1.bf16.msra.mxu0 0
      %709 = vmatprep.subr.bf16.mxu0 0
      %710 = vmatpush1.bf16.msra.mxu0 0
      %711 = vmatprep.subr.bf16.mxu0 0
      %712 = vmatpush1.bf16.msra.mxu0 0
      %713 = vmatprep.subr.bf16.mxu0 0
      %714 = vmatpush1.bf16.msra.mxu0 %v659
      %715 = vmatprep.subr.bf16.mxu0 0
      %716 = vmatpush1.bf16.msra.mxu0 %v658
      %717 = vmatprep.subr.bf16.mxu0 0
      %718 = vmatpush2.bf16.msra.mxu0 0
      %719 = vmatprep.subr.bf16.mxu0 0
      %720 = vmatpush2.bf16.msra.mxu0 0
      %721 = vmatprep.subr.bf16.mxu0 0
      %722 = vmatpush2.bf16.msra.mxu0 0
      %723 = vmatprep.subr.bf16.mxu0 0
      %724 = vmatpush2.bf16.msra.mxu0 0
      %725 = vmatprep.subr.bf16.mxu0 0
      %726 = vmatpush2.bf16.msra.mxu0 0
      %727 = vmatprep.subr.bf16.mxu0 0
      %728 = vmatpush2.bf16.msra.mxu0 0
      %729 = vmatprep.subr.bf16.mxu0 0
      %730 = vmatpush2.bf16.msra.mxu0 0
      %731 = vmatprep.subr.bf16.mxu0 0
      %732 = vmatpush2.bf16.msra.mxu0 0
      %733 = vmatprep.mubr.bf16.mxu0 0
      %734 = vmatmul.mubr.bf16.gmra.mxu0 %v696
      %v735 = vpop.f32.mrf.mxu0
      %v736 = vadd.f32 %v667, %v735
      %v737 = vpop.f32.mrf.mxu0
      %v738 = vpop.f32.mrf.mxu0
      %v739 = vadd.f32 %v672, %v738
      %v740 = vpop.f32.mrf.mxu0
      %741 = vmatprep.mubr.bf16.mxu0 0
      %742 = vmatmul.mubr.bf16.gmra.mxu0 %v699
      %v743 = vpop.f32.mrf.mxu0
      %v744 = vadd.f32 %v677, %v743
      %v745 = vpop.f32.mrf.mxu0
      %v746 = vpop.f32.mrf.mxu0
      %v747 = vadd.f32 %v682, %v746
      %v748 = vpop.f32.mrf.mxu0
      %749 = vdwg.mxu0
      %v750 = vmax.f32 %v736, 0.0
      %v751 = vmax.f32 %v739, 0.0
      %v752 = vmax.f32 %v744, 0.0
      %v753 = vmax.f32 %v747, 0.0
      %v754 = vld [vmem:[%s5] sm:$0xf]
      %v755 = vld [vmem:[%s5 + $0x4] sm:$0xf]
      %v756 = vld [vmem:[%s5 + $0x8] sm:$0xf]
      %v757 = vld [vmem:[%s5 + $0xc] sm:$0xf]
      %v758 = vpack.c.bf16 %v751, %v750
      %v759 = vpack.c.bf16 %v753, %v752
      %v760 = vld [vmem:[%s6] sm:$0xff]
      %v761 = vld [vmem:[%s6 + $0x8] sm:$0xff]
      %v762 = vld [vmem:[%s6 + $0x10] sm:$0xff]
      %v763 = vld [vmem:[%s6 + $0x18] sm:$0xff]
      %765 = vset.pattern.permute.xlu0 0
      %766 = vperm.xlu0 %765, %v760
      %v767 = vpop.permute.xlu0 %766
      %770 = vset.pattern.permute.xlu0 0
      %771 = vperm.xlu0 %770, %v761
      %v772 = vpop.permute.xlu0 %771
      %775 = vset.pattern.permute.xlu0 0
      %776 = vperm.xlu0 %775, %v762
      %v777 = vpop.permute.xlu0 %776
      %780 = vset.pattern.permute.xlu0 0
      %781 = vperm.xlu0 %780, %v763
      %v782 = vpop.permute.xlu0 %781
      %v788 = vunpack.c.l.b16 %v754
      %v789 = vunpack.c.l.b16 %v755
      %v790 = vunpack.c.l.b16 %v756
      %v791 = vunpack.c.l.b16 %v757
      %v792 = vpack.c.b16 %v789, %v788
      %v793 = vpack.c.b16 %v791, %v790
      %v795 = vsel %vm694, %v792, 0
      %v798 = vsel %vm694, %v793, 0
      %800 = vmatprep.subr.bf16.mxu0 0
      %801 = vmatpush1.bf16.msra.mxu0 0
      %802 = vmatprep.subr.bf16.mxu0 0
      %803 = vmatpush1.bf16.msra.mxu0 0
      %804 = vmatprep.subr.bf16.mxu0 0
      %805 = vmatpush1.bf16.msra.mxu0 0
      %806 = vmatprep.subr.bf16.mxu0 0
      %807 = vmatpush1.bf16.msra.mxu0 0
      %808 = vmatprep.subr.bf16.mxu0 0
      %809 = vmatpush1.bf16.msra.mxu0 0
      %810 = vmatprep.subr.bf16.mxu0 0
      %811 = vmatpush1.bf16.msra.mxu0 0
      %812 = vmatprep.subr.bf16.mxu0 0
      %813 = vmatpush1.bf16.msra.mxu0 %v759
      %814 = vmatprep.subr.bf16.mxu0 0
      %815 = vmatpush1.bf16.msra.mxu0 %v758
      %816 = vmatprep.subr.bf16.mxu0 0
      %817 = vmatpush2.bf16.msra.mxu0 0
      %818 = vmatprep.subr.bf16.mxu0 0
      %819 = vmatpush2.bf16.msra.mxu0 0
      %820 = vmatprep.subr.bf16.mxu0 0
      %821 = vmatpush2.bf16.msra.mxu0 0
      %822 = vmatprep.subr.bf16.mxu0 0
      %823 = vmatpush2.bf16.msra.mxu0 0
      %824 = vmatprep.subr.bf16.mxu0 0
      %825 = vmatpush2.bf16.msra.mxu0 0
      %826 = vmatprep.subr.bf16.mxu0 0
      %827 = vmatpush2.bf16.msra.mxu0 0
      %828 = vmatprep.subr.bf16.mxu0 0
      %829 = vmatpush2.bf16.msra.mxu0 0
      %830 = vmatprep.subr.bf16.mxu0 0
      %831 = vmatpush2.bf16.msra.mxu0 0
      %832 = vmatprep.mubr.bf16.mxu0 0
      %833 = vmatmul.mubr.bf16.gmra.mxu0 %v795
      %v834 = vpop.f32.mrf.mxu0
      %v835 = vadd.f32 %v767, %v834
      %v836 = vpop.f32.mrf.mxu0
      %v837 = vpop.f32.mrf.mxu0
      %v838 = vadd.f32 %v772, %v837
      %v839 = vpop.f32.mrf.mxu0
      %840 = vmatprep.mubr.bf16.mxu0 0
      %841 = vmatmul.mubr.bf16.gmra.mxu0 %v798
      %v842 = vpop.f32.mrf.mxu0
      %v843 = vadd.f32 %v777, %v842
      %v844 = vpop.f32.mrf.mxu0
      %v845 = vpop.f32.mrf.mxu0
      %v846 = vadd.f32 %v782, %v845
      %v847 = vpop.f32.mrf.mxu0
      %848 = vdwg.mxu0
      %849 = vst.msk [vmem:[%s458] sm:$0xff] %vm590, %v835
      %850 = vst.msk [vmem:[%s458 + $0x8] sm:$0xff] %vm590, %v838
      %851 = vst.msk [vmem:[%s458 + $0x10] sm:$0xff] %vm590, %v843
      %852 = vst.msk [vmem:[%s458 + $0x18] sm:$0xff] %vm590, %v846
      %v853 = vsel %vm590, %v835, -inf
      %v854 = vsel %vm590, %v838, -inf
      %v855 = vsel %vm590, %v843, -inf
      %v856 = vsel %vm590, %v846, -inf
      %v857 = vmax.f32 %v853, %v854
      %v858 = vmax.f32 %v855, %v856
      %v859 = vmax.f32 %v857, %v858
      %v860 = vrot.slane %v859, 4
      %v861 = vmax.f32 %v859, %v860
      %v862 = vrot.slane %v861, 2
      %v863 = vmax.f32 %v861, %v862
      %v864 = vrot.slane %v863, 1
      %v865 = vmax.f32 %v863, %v864
      %v866 = vsub.f32 %v835, %v865
      %v867 = vsub.f32 %v838, %v865
      %v868 = vsub.f32 %v843, %v865
      %v869 = vsub.f32 %v846, %v865
      %v870 = vmul.f32 %v866, 1.442695
      %v871 = vpow.pop %v870
      %v872 = vmul.f32 %v867, 1.442695
      %v873 = vpow.pop %v872
      %v874 = vmul.f32 %v868, 1.442695
      %v875 = vpow.pop %v874
      %v876 = vmul.f32 %v869, 1.442695
      %v877 = vpow.pop %v876
      %v878 = vsel %vm590, %v871, 0.0
      %v879 = vsel %vm590, %v873, 0.0
      %v880 = vadd.f32 %v878, %v879
      %v881 = vsel %vm590, %v875, 0.0
      %v882 = vadd.f32 %v880, %v881
      %v883 = vsel %vm590, %v877, 0.0
      %v884 = vadd.f32 %v882, %v883
      %v885 = vrot.slane %v884, 4
      %v886 = vadd.f32 %v884, %v885
      %v887 = vrot.slane %v886, 2
      %v888 = vadd.f32 %v886, %v887
      %v889 = vrot.slane %v888, 1
      %v890 = vadd.f32 %v888, %v889
      %v891 = vld [vmem:[%s7] sm:$0xff]
      %v892 = vld [vmem:[%s7 + $0x8] sm:$0xff]
      %v893 = vld [vmem:[%s7 + $0x10] sm:$0xff]
      %v894 = vld [vmem:[%s7 + $0x18] sm:$0xff]
      %896 = vset.pattern.permute.xlu0 0
      %897 = vperm.xlu0 %896, %v891
      %v898 = vpop.permute.xlu0 %897
      %901 = vset.pattern.permute.xlu0 0
      %902 = vperm.xlu0 %901, %v892
      %v903 = vpop.permute.xlu0 %902
      %906 = vset.pattern.permute.xlu0 0
      %907 = vperm.xlu0 %906, %v893
      %v908 = vpop.permute.xlu0 %907
      %911 = vset.pattern.permute.xlu0 0
      %912 = vperm.xlu0 %911, %v894
      %v913 = vpop.permute.xlu0 %912
      %v915 = vmul.f32 %v871, %v898
      %v916 = vmul.f32 %v873, %v903
      %v917 = vmul.f32 %v875, %v908
      %v918 = vmul.f32 %v877, %v913
      %v919 = vsel %vm590, %v915, 0.0
      %v920 = vsel %vm590, %v916, 0.0
      %v921 = vadd.f32 %v919, %v920
      %v922 = vsel %vm590, %v917, 0.0
      %v923 = vadd.f32 %v921, %v922
      %v924 = vsel %vm590, %v918, 0.0
      %v925 = vadd.f32 %v923, %v924
      %v926 = vrot.slane %v925, 4
      %v927 = vadd.f32 %v925, %v926
      %v928 = vrot.slane %v927, 2
      %v929 = vadd.f32 %v927, %v928
      %v930 = vrot.slane %v929, 1
      %v931 = vadd.f32 %v929, %v930
      %v932 = vrcp.pop %v890
      %v933 = vmul.f32 %v931, %v932
      %v934 = vmul.f32 %v933, 0.001
      %vm935 = vcmask 122880
      %936 = vst.msk [vmem:[%s464] sm:$0x1] %vm935, %v934
      %v937 = vlaneseq
      %v938 = vshrl.u32 %v937, 7
      %v939 = vadd.s32 %v938, 8
      %v940 = vadd.s32 %v938, 16
      %v941 = vadd.s32 %v938, 24
      %vm942 = vcmp.eq.f32.partialorder %v835, %v865
      %vm943 = vcmp.eq.f32.partialorder %v838, %v865
      %vm944 = vcmp.eq.f32.partialorder %v843, %v865
      %vm945 = vcmp.eq.f32.partialorder %v846, %v865
      %v946 = vsel %vm942, %v938, 32
      %v947 = vsel %vm943, %v939, 32
      %v948 = vsel %vm944, %v940, 32
      %v949 = vsel %vm945, %v941, 32
      %v950 = vsel %vm590, %v946, 2147483647
      %v951 = vsel %vm590, %v947, 2147483647
      %v952 = vsel %vm590, %v948, 2147483647
      %v953 = vsel %vm590, %v949, 2147483647
      %vm954 = vcmp.lt.s32.totalorder %v950, %v951
      %v955 = vsel %vm954, %v950, %v951
      %vm956 = vcmp.lt.s32.totalorder %v952, %v953
      %v957 = vsel %vm956, %v952, %v953
      %vm958 = vcmp.lt.s32.totalorder %v955, %v957
      %v959 = vsel %vm958, %v955, %v957
      %v960 = vrot.slane %v959, 4
      %vm961 = vcmp.lt.s32.totalorder %v959, %v960
      %v962 = vsel %vm961, %v959, %v960
      %v963 = vrot.slane %v962, 2
      %vm964 = vcmp.lt.s32.totalorder %v962, %v963
      %v965 = vsel %vm964, %v962, %v963
      %v966 = vrot.slane %v965, 1
      %vm967 = vcmp.lt.s32.totalorder %v965, %v966
      %v968 = vsel %vm967, %v965, %v966
      %969 = vst.msk [vmem:[%s470] sm:$0x1] %vm935, %v968
      %p970 = scmp.lt.s32.totalorder %s27, 1
      %s971 = scalar_select %p970, %s27, 1
      %p972 = scmp.lt.s32.totalorder %s28, 0
      %s973 = scalar_select %p972, %s28, 0
      %s974 = smul.addr %s971, 4
      %s975 = sadd.s32 %s973, %s974
      %s976 = smul.addr %s975, 8
      %s977 = scalar_lea.vmem %s8, %s976
      %p978 = scmp.lt.s32.totalorder %s27, 1
      %s979 = scalar_select %p978, %s27, 1
      %p980 = scmp.lt.s32.totalorder %s28, 0
      %s981 = scalar_select %p980, %s28, 0
      %s982 = smul.addr %s979, 4
      %s983 = sadd.s32 %s981, %s982
      %s984 = smul.addr %s983, 8
      %s985 = scalar_lea.vmem %s9, %s984
      %p986 = scmp.lt.s32.totalorder %s27, 1
      %s987 = scalar_select %p986, %s27, 1
      %p988 = scmp.lt.s32.totalorder %s28, 0
      %s989 = scalar_select %p988, %s28, 0
      %s990 = sadd.s32 %s989, %s987
      %s991 = scalar_lea.vmem %s10, %s990
      %p992 = scmp.lt.s32.totalorder %s27, 1
      %s993 = scalar_select %p992, %s27, 1
      %p994 = scmp.lt.s32.totalorder %s28, 0
      %s995 = scalar_select %p994, %s28, 0
      %s996 = sadd.s32 %s995, %s993
      %s997 = scalar_lea.vmem %s11, %s996
      // Predicated region
      $region53: #{depth_completion_forward.3} parent=51 // pred_check
        %p998 = pneg %p230
      $region54: #{depth_completion_forward.3} parent=51 // pred_check_branch
        %1000 = sbr.rel (%p998) target = $region56
      $region55: #{depth_completion_forward.3} parent=51 // pred_region
        _
      $region56: #{depth_completion_forward.3} parent=51 // pred_fallthru
        _
      // Predicated region
      $region57: #{depth_completion_forward.3} parent=51 // pred_check
        %p1001 = pneg %p258
      $region58: #{depth_completion_forward.3} parent=51 // pred_check_branch
        %1003 = sbr.rel (%p1001) target = $region60
      $region59: #{depth_completion_forward.3} parent=51 // pred_region
        _
      $region60: #{depth_completion_forward.3} parent=51 // pred_fallthru
        _
      // Predicated region
      $region61: #{depth_completion_forward.3} parent=51 // pred_check
        %p1004 = pneg %p286
      $region62: #{depth_completion_forward.3} parent=51 // pred_check_branch
        %1006 = sbr.rel (%p1004) target = $region64
      $region63: #{depth_completion_forward.3} parent=51 // pred_region
        _
      $region64: #{depth_completion_forward.3} parent=51 // pred_fallthru
        _
      // Predicated region
      $region65: #{depth_completion_forward.3} parent=51 // pred_check
        %p1007 = pneg %p314
      $region66: #{depth_completion_forward.3} parent=51 // pred_check_branch
        %1009 = sbr.rel (%p1007) target = $region68
      $region67: #{depth_completion_forward.3} parent=51 // pred_region
        _
      $region68: #{depth_completion_forward.3} parent=51 // pred_fallthru
        _
    $region52: #{depth_completion_forward.3} parent=5 // pred_fallthru
      _
    %p1010 = scmp.le.s32.totalorder 2, %s18
    // Predicated region
    $region69: #{depth_completion_forward.3} parent=5 // pred_check
      %p1011 = pneg %p1010
    $region70: #{depth_completion_forward.3} parent=5 // pred_check_branch
      %1013 = sbr.rel (%p1011) target = $region72
    $region71: #{depth_completion_forward.3} parent=5 // pred_region
      %s1014 = ssub.s32 %s18, 2
      // Predicated region
      $region73: #{depth_completion_forward.3} parent=71 // pred_check
        %p1015 = pneg %p236
      $region74: #{depth_completion_forward.3} parent=71 // pred_check_branch
        %1017 = sbr.rel (%p1015) target = $region76
      $region75: #{depth_completion_forward.3} parent=71 // pred_region
        %p1018 = scmp.lt.s32.totalorder %s29, 1
        %s1019 = scalar_select %p1018, %s29, 1
        %p1020 = scmp.lt.s32.totalorder %s30, 0
        %s1021 = scalar_select %p1020, %s30, 0
        %s1022 = smul.addr %s1019, 4
        %s1023 = sadd.s32 %s1021, %s1022
        %s1024 = smul.addr %s1023, 8
        %s1025 = scalar_lea.vmem %s8, %s1024
      $region76: #{depth_completion_forward.3} parent=71 // pred_fallthru
        _
      // Predicated region
      $region77: #{depth_completion_forward.3} parent=71 // pred_check
        %p1026 = pneg %p264
      $region78: #{depth_completion_forward.3} parent=71 // pred_check_branch
        %1028 = sbr.rel (%p1026) target = $region80
      $region79: #{depth_completion_forward.3} parent=71 // pred_region
        %p1029 = scmp.lt.s32.totalorder %s29, 1
        %s1030 = scalar_select %p1029, %s29, 1
        %p1031 = scmp.lt.s32.totalorder %s30, 0
        %s1032 = scalar_select %p1031, %s30, 0
        %s1033 = smul.addr %s1030, 4
        %s1034 = sadd.s32 %s1032, %s1033
        %s1035 = smul.addr %s1034, 8
        %s1036 = scalar_lea.vmem %s9, %s1035
      $region80: #{depth_completion_forward.3} parent=71 // pred_fallthru
        _
      // Predicated region
      $region81: #{depth_completion_forward.3} parent=71 // pred_check
        %p1037 = pneg %p292
      $region82: #{depth_completion_forward.3} parent=71 // pred_check_branch
        %1039 = sbr.rel (%p1037) target = $region84
      $region83: #{depth_completion_forward.3} parent=71 // pred_region
        %p1040 = scmp.lt.s32.totalorder %s29, 1
        %s1041 = scalar_select %p1040, %s29, 1
        %p1042 = scmp.lt.s32.totalorder %s30, 0
        %s1043 = scalar_select %p1042, %s30, 0
        %s1044 = sadd.s32 %s1043, %s1041
        %s1045 = scalar_lea.vmem %s10, %s1044
      $region84: #{depth_completion_forward.3} parent=71 // pred_fallthru
        _
      // Predicated region
      $region85: #{depth_completion_forward.3} parent=71 // pred_check
        %p1046 = pneg %p320
      $region86: #{depth_completion_forward.3} parent=71 // pred_check_branch
        %1048 = sbr.rel (%p1046) target = $region88
      $region87: #{depth_completion_forward.3} parent=71 // pred_region
        %p1049 = scmp.lt.s32.totalorder %s29, 1
        %s1050 = scalar_select %p1049, %s29, 1
        %p1051 = scmp.lt.s32.totalorder %s30, 0
        %s1052 = scalar_select %p1051, %s30, 0
        %s1053 = sadd.s32 %s1052, %s1050
        %s1054 = scalar_lea.vmem %s11, %s1053
      $region88: #{depth_completion_forward.3} parent=71 // pred_fallthru
        _
    $region72: #{depth_completion_forward.3} parent=5 // pred_fallthru
      _
  $region6: #{depth_completion_forward.3} parent=0 // loop_footer
    %s22 = sadd.s32 1, %s18
  $region7: #{depth_completion_forward.3} parent=0 // loop_footer_branch
    %17 = sbr.rel target = $region3
  $region8: #{depth_completion_forward.3} parent=0 // loop_exit
    _

</llo_original>
